<compile_context>
chip_gen: v5e
topology: v5e:2x2
jax: 0.10.0
libtpu: 0.0.40
codegen_flags: <defaults>
</compile_context>

<pallas_src>
import functools

import jax
import jax.numpy as jnp
from jax.experimental import pallas as pl
from jax.experimental.pallas import tpu as pltpu


def _round_up(x, m):
    return (x + m - 1) // m * m


def _pick_tile(S, max_tile):
    """Largest divisor of S <= max_tile, preferring sublane-aligned (mult of 8)."""
    best = None
    for t in range(min(S, max_tile), 0, -1):
        if S % t == 0:
            if t % 8 == 0:
                return t
            if best is None:
                best = t
    # TODO(synk): if S has no multiple-of-8 divisor the out block may violate the
    # (8,128) tiling rule for B > 1; pad S in the wrapper in that case.
    return best if best is not None else S


def _albert_emb_kernel(ids_ref, word_hbm, pos_tok_ref, gamma_ref, beta_ref,
                       out_ref, gbuf, sems,
                       *, tile_s, s_tiles, e_true, e_pad, eps):
    """One grid step = one (tile_s, e_pad) token tile of one batch row.

    gbuf is a flattened double buffer of shape (2*tile_s, e_pad); slot `k` owns
    rows [k*tile_s, (k+1)*tile_s).  sems has one DMA semaphore per buffered row.
    """
    b = pl.program_id(0)
    st = pl.program_id(1)
    cur = st % 2          # slot holding the current tile's rows
    nxt = 1 - cur         # slot we prefetch the next tile into

    def issue(tile_idx, slot):
        base = pl.multiple_of(slot * tile_s, tile_s)
        for j in range(tile_s):
            row = ids_ref[b, tile_idx * tile_s + j]
            pltpu.make_async_copy(
                word_hbm.at[pl.ds(row, 1), :],
                gbuf.at[pl.ds(base + j, 1), :],
                sems.at[base + j],
            ).start()

    # Prime the pipeline at the first token tile of each batch row.
    @pl.when(st == 0)
    def _():
        issue(st, cur)

    # Prefetch the next token tile (same batch row) while this one computes.
    @pl.when(st + 1 < s_tiles)
    def _():
        issue(st + 1, nxt)

    # Wait for the current tile's gathered rows.
    cur_base = pl.multiple_of(cur * tile_s, tile_s)
    for j in range(tile_s):
        pltpu.make_async_copy(
            word_hbm.at[pl.ds(0, 1), :],             # shape/byte-count descriptor
            gbuf.at[pl.ds(cur_base + j, 1), :],
            sems.at[cur_base + j],
        ).wait()

    # ---- embedding sum: single broadcast add (pos + token-type pre-folded) ----
    x = gbuf[pl.ds(cur_base, tile_s), :] + pos_tok_ref[...]   # (tile_s, e_pad)

    # ---- LayerNorm over the true embedding width (padded lanes hold zeros) ----
    inv_e = 1.0 / e_true
    mean = jnp.sum(x, axis=-1, keepdims=True) * inv_e
    xc = x - mean
    if e_pad != e_true:
        lane = jax.lax.broadcasted_iota(jnp.int32, (1, e_pad), 1)
        xc = xc * (lane < e_true).astype(jnp.float32)         # zero padded lanes
    var = jnp.sum(xc * xc, axis=-1, keepdims=True) * inv_e
    inv = jax.lax.rsqrt(var + eps)
    out_ref[...] = xc * inv * gamma_ref[...] + beta_ref[...]
    # dropout is identity in eval mode -> nothing to do.


def emb_wrapper_forward(input_ids, extended_attention_mask, params,
                        *, eps=1e-12, max_tile=512):
    """Returns (embeddings (B,S,E) f32, extended_attention_mask unchanged)."""
    word_emb, pos_emb_full, tok_type_emb, gamma, beta = params
    B, S = input_ids.shape
    V, E = word_emb.shape

    # Lane-dense kernel width (>=128, multiple of 128).
    E_pad = max(128, _round_up(E, 128))
    pad = E_pad - E

    tile_s = _pick_tile(S, max_tile)
    s_tiles = S // tile_s

    def pad_e(a):
        a = a.astype(jnp.float32)
        return jnp.pad(a, ((0, 0), (0, pad))) if pad else a

    word_p = pad_e(word_emb)                                   # stays in HBM
    # position_ids = arange(S), token_type_ids = 0 -> fold into one bias table.
    pos_tok = pad_e(pos_emb_full[:S] + tok_type_emb[0][None, :])
    gamma_p = pad_e(gamma.reshape(1, E))
    beta_p = pad_e(beta.reshape(1, E))

    # Clamp ids so the DMA gather can never read out of bounds.
    ids = jnp.clip(input_ids.astype(jnp.int32), 0, V - 1)

    kernel = functools.partial(_albert_emb_kernel, tile_s=tile_s, s_tiles=s_tiles,
                               e_true=E, e_pad=E_pad, eps=eps)

    grid_spec = pltpu.PrefetchScalarGridSpec(
        num_scalar_prefetch=1,                  # ids -> SMEM, visible to index_maps
        grid=(B, s_tiles),
        in_specs=[
            pl.BlockSpec(memory_space=pl.ANY),                           # word table (HBM)
            pl.BlockSpec((tile_s, E_pad), lambda b, st, idr: (st, 0)),   # pos+token-type bias
            pl.BlockSpec((1, E_pad), lambda b, st, idr: (0, 0)),         # gamma (resident)
            pl.BlockSpec((1, E_pad), lambda b, st, idr: (0, 0)),         # beta  (resident)
        ],
        out_specs=pl.BlockSpec((tile_s, E_pad),
                               lambda b, st, idr: (b * s_tiles + st, 0)),
        scratch_shapes=[
            pltpu.VMEM((2 * tile_s, E_pad), jnp.float32),   # double-buffered gather slab
            pltpu.SemaphoreType.DMA((2 * tile_s,)),         # one sem per buffered row
        ],
    )

    out = pl.pallas_call(
        kernel,
        out_shape=jax.ShapeDtypeStruct((B * S, E_pad), jnp.float32),
        grid_spec=grid_spec,
        compiler_params=pltpu.CompilerParams(
            # seq-tile axis must stay sequential for the cross-step prefetch;
            # batch axis can be split across TensorCores.
            dimension_semantics=("parallel", "arbitrary")),
    )(ids, word_p, pos_tok, gamma_p, beta_p)

    emb = out[:, :E].reshape(B, S, E)
    # extended_attention_mask is a pure pass-through in the PyTorch module.
    return emb, extended_attention_mask


if __name__ == "__main__":
    # Small synthetic ALBERT-like config.
    B, S = 2, 16         # batch, sequence length
    V = 128              # vocab size
    E = 32               # embedding size
    MAX_POS = 32         # max position embeddings
    TYPE_V = 2           # token type vocab

    key = jax.random.PRNGKey(0)
    k_ids, k_w, k_p, k_t, k_g, k_b, k_m = jax.random.split(key, 7)

    input_ids = jax.random.randint(k_ids, (B, S), 0, V, dtype=jnp.int32)
    # extended attention mask: (B, 1, 1, S), 0 for attend / -10000 for masked.
    extended_attention_mask = jnp.where(
        jax.random.uniform(k_m, (B, 1, 1, S)) > 0.2, 0.0, -10000.0
    ).astype(jnp.float32)

    # Deterministic synthetic parameters (shapes match AlbertEmbeddings).
    word_emb = 0.02 * jax.random.normal(k_w, (V, E), dtype=jnp.float32)
    pos_emb = 0.02 * jax.random.normal(k_p, (MAX_POS, E), dtype=jnp.float32)
    tok_type_emb = 0.02 * jax.random.normal(k_t, (TYPE_V, E), dtype=jnp.float32)
    gamma = 1.0 + 0.01 * jax.random.normal(k_g, (E,), dtype=jnp.float32)
    beta = 0.01 * jax.random.normal(k_b, (E,), dtype=jnp.float32)

    params = (word_emb, pos_emb, tok_type_emb, gamma, beta)

    # max_tile=8 -> two token tiles per batch row, so the cross-step
    # double-buffered gather prefetch path is actually exercised.
    emb_out, mask_out = emb_wrapper_forward(
        input_ids, extended_attention_mask, params, max_tile=8)
    jax.block_until_ready(emb_out)
    jax.block_until_ready(mask_out)

    # Sanity-check against a pure-JAX reference.
    ref = word_emb[input_ids] + pos_emb[:S][None] + tok_type_emb[0][None, None]
    mu = ref.mean(-1, keepdims=True)
    var = ((ref - mu) ** 2).mean(-1, keepdims=True)
    ref = (ref - mu) * jax.lax.rsqrt(var + 1e-12) * gamma + beta
    assert jnp.allclose(emb_out, ref, atol=1e-5, rtol=1e-5)
    assert (mask_out == extended_attention_mask).all()

    print("KERNEL_OK")
</pallas_src>

<mosaic_0001>
module attributes {stable_mosaic.version = 11 : i64} {
  func.func @_albert_emb_kernel(%arg0: i32, %arg1: i32, %arg2: memref<2x16xi32, #tpu.memory_space<smem>>, %arg3: memref<128x128xf32, #tpu.memory_space<any>>, %arg4: memref<8x128xf32, #tpu.memory_space<vmem>>, %arg5: memref<1x128xf32, #tpu.memory_space<vmem>>, %arg6: memref<1x128xf32, #tpu.memory_space<vmem>>, %arg7: memref<8x128xf32, #tpu.memory_space<vmem>>, %arg8: memref<16x128xf32, #tpu.memory_space<vmem>>, %arg9: memref<16x!tpu.dma_semaphore, #tpu.memory_space<semaphore_mem>>) attributes {dimension_semantics = [#tpu.dimension_semantics<parallel>, #tpu.dimension_semantics<arbitrary>], iteration_bounds = array<i64: 2, 2>, scalar_prefetch = 1 : i64, scratch_operands = 2 : i64, tpu.core_type = #tpu.core_type<tc>, window_params = [{}, {transform_indices = @transform_1, window_bounds = array<i64: 8, 128>}, {pipeline_mode = #tpu.pipeline_mode<synchronous>, transform_indices = @transform_2, window_bounds = array<i64: 1, 128>}, {pipeline_mode = #tpu.pipeline_mode<synchronous>, transform_indices = @transform_3, window_bounds = array<i64: 1, 128>}, {transform_indices = @transform_4, window_bounds = array<i64: 8, 128>}]} {
    %c2_i32 = arith.constant 2 : i32
    %c0_i32 = arith.constant 0 : i32
    %0 = arith.cmpi eq, %c2_i32, %c0_i32 : i32
    %c1_i32 = arith.constant 1 : i32
    %1 = arith.select %0, %c1_i32, %c2_i32 : i32
    %2 = arith.remsi %arg1, %1 : i32
    %c0_i32_0 = arith.constant 0 : i32
    %3 = arith.cmpi ne, %2, %c0_i32_0 : i32
    %c0_i32_1 = arith.constant 0 : i32
    %4 = arith.cmpi slt, %2, %c0_i32_1 : i32
    %c0_i32_2 = arith.constant 0 : i32
    %5 = arith.cmpi slt, %1, %c0_i32_2 : i32
    %6 = arith.xori %4, %5 : i1
    %7 = arith.andi %6, %3 : i1
    %8 = arith.addi %2, %1 : i32
    %9 = arith.select %7, %8, %2 : i32
    %c1_i32_3 = arith.constant 1 : i32
    %10 = arith.subi %c1_i32_3, %9 : i32
    %c0_i32_4 = arith.constant 0 : i32
    %11 = arith.cmpi eq, %arg1, %c0_i32_4 : i32
    %12 = arith.extui %11 : i1 to i32
    %c0_i32_5 = arith.constant 0 : i32
    %13 = arith.cmpi ne, %12, %c0_i32_5 : i32
    scf.if %13 {
      %c8_i32_56 = arith.constant 8 : i32
      %102 = arith.muli %9, %c8_i32_56 : i32
      %103 = tpu.assume_multiple %102, 8 : i32
      %c8_i32_57 = arith.constant 8 : i32
      %104 = arith.muli %arg1, %c8_i32_57 : i32
      %c0_i32_58 = arith.constant 0 : i32
      %105 = arith.addi %104, %c0_i32_58 : i32
      %106 = arith.index_cast %arg0 : i32 to index
      %107 = arith.index_cast %105 : i32 to index
      %108 = memref.load %arg2[%106, %107] : memref<2x16xi32, #tpu.memory_space<smem>>
      %c0_i32_59 = arith.constant 0 : i32
      %109 = arith.addi %103, %c0_i32_59 : i32
      %c0_i32_60 = arith.constant 0 : i32
      %110 = arith.addi %103, %c0_i32_60 : i32
      %c0_i32_61 = arith.constant 0 : i32
      %111 = tpu.memref_slice %arg3[%108, %c0_i32_61] : memref<128x128xf32, #tpu.memory_space<any>> -> memref<1x128xf32, #tpu.memory_space<any>>
      %c0_i32_62 = arith.constant 0 : i32
      %112 = tpu.memref_slice %arg8[%109, %c0_i32_62] : memref<16x128xf32, #tpu.memory_space<vmem>> -> memref<1x128xf32, #tpu.memory_space<vmem>>
      %113 = tpu.memref_slice %arg9[%110] : memref<16x!tpu.dma_semaphore, #tpu.memory_space<semaphore_mem>> -> memref<1x!tpu.dma_semaphore, #tpu.memory_space<semaphore_mem>>
      %114 = tpu.memref_squeeze %113 : memref<1x!tpu.dma_semaphore, #tpu.memory_space<semaphore_mem>> -> memref<!tpu.dma_semaphore, #tpu.memory_space<semaphore_mem>>
      tpu.enqueue_dma source(%111 : memref<1x128xf32, #tpu.memory_space<any>>) target(%112 : memref<1x128xf32, #tpu.memory_space<vmem>>) target_semaphore(%114 : memref<!tpu.dma_semaphore, #tpu.memory_space<semaphore_mem>>)
      %c8_i32_63 = arith.constant 8 : i32
      %115 = arith.muli %arg1, %c8_i32_63 : i32
      %c1_i32_64 = arith.constant 1 : i32
      %116 = arith.addi %115, %c1_i32_64 : i32
      %117 = arith.index_cast %arg0 : i32 to index
      %118 = arith.index_cast %116 : i32 to index
      %119 = memref.load %arg2[%117, %118] : memref<2x16xi32, #tpu.memory_space<smem>>
      %c1_i32_65 = arith.constant 1 : i32
      %120 = arith.addi %103, %c1_i32_65 : i32
      %c1_i32_66 = arith.constant 1 : i32
      %121 = arith.addi %103, %c1_i32_66 : i32
      %c0_i32_67 = arith.constant 0 : i32
      %122 = tpu.memref_slice %arg3[%119, %c0_i32_67] : memref<128x128xf32, #tpu.memory_space<any>> -> memref<1x128xf32, #tpu.memory_space<any>>
      %c0_i32_68 = arith.constant 0 : i32
      %123 = tpu.memref_slice %arg8[%120, %c0_i32_68] : memref<16x128xf32, #tpu.memory_space<vmem>> -> memref<1x128xf32, #tpu.memory_space<vmem>>
      %124 = tpu.memref_slice %arg9[%121] : memref<16x!tpu.dma_semaphore, #tpu.memory_space<semaphore_mem>> -> memref<1x!tpu.dma_semaphore, #tpu.memory_space<semaphore_mem>>
      %125 = tpu.memref_squeeze %124 : memref<1x!tpu.dma_semaphore, #tpu.memory_space<semaphore_mem>> -> memref<!tpu.dma_semaphore, #tpu.memory_space<semaphore_mem>>
      tpu.enqueue_dma source(%122 : memref<1x128xf32, #tpu.memory_space<any>>) target(%123 : memref<1x128xf32, #tpu.memory_space<vmem>>) target_semaphore(%125 : memref<!tpu.dma_semaphore, #tpu.memory_space<semaphore_mem>>)
      %c8_i32_69 = arith.constant 8 : i32
      %126 = arith.muli %arg1, %c8_i32_69 : i32
      %c2_i32_70 = arith.constant 2 : i32
      %127 = arith.addi %126, %c2_i32_70 : i32
      %128 = arith.index_cast %arg0 : i32 to index
      %129 = arith.index_cast %127 : i32 to index
      %130 = memref.load %arg2[%128, %129] : memref<2x16xi32, #tpu.memory_space<smem>>
      %c2_i32_71 = arith.constant 2 : i32
      %131 = arith.addi %103, %c2_i32_71 : i32
      %c2_i32_72 = arith.constant 2 : i32
      %132 = arith.addi %103, %c2_i32_72 : i32
      %c0_i32_73 = arith.constant 0 : i32
      %133 = tpu.memref_slice %arg3[%130, %c0_i32_73] : memref<128x128xf32, #tpu.memory_space<any>> -> memref<1x128xf32, #tpu.memory_space<any>>
      %c0_i32_74 = arith.constant 0 : i32
      %134 = tpu.memref_slice %arg8[%131, %c0_i32_74] : memref<16x128xf32, #tpu.memory_space<vmem>> -> memref<1x128xf32, #tpu.memory_space<vmem>>
      %135 = tpu.memref_slice %arg9[%132] : memref<16x!tpu.dma_semaphore, #tpu.memory_space<semaphore_mem>> -> memref<1x!tpu.dma_semaphore, #tpu.memory_space<semaphore_mem>>
      %136 = tpu.memref_squeeze %135 : memref<1x!tpu.dma_semaphore, #tpu.memory_space<semaphore_mem>> -> memref<!tpu.dma_semaphore, #tpu.memory_space<semaphore_mem>>
      tpu.enqueue_dma source(%133 : memref<1x128xf32, #tpu.memory_space<any>>) target(%134 : memref<1x128xf32, #tpu.memory_space<vmem>>) target_semaphore(%136 : memref<!tpu.dma_semaphore, #tpu.memory_space<semaphore_mem>>)
      %c8_i32_75 = arith.constant 8 : i32
      %137 = arith.muli %arg1, %c8_i32_75 : i32
      %c3_i32_76 = arith.constant 3 : i32
      %138 = arith.addi %137, %c3_i32_76 : i32
      %139 = arith.index_cast %arg0 : i32 to index
      %140 = arith.index_cast %138 : i32 to index
      %141 = memref.load %arg2[%139, %140] : memref<2x16xi32, #tpu.memory_space<smem>>
      %c3_i32_77 = arith.constant 3 : i32
      %142 = arith.addi %103, %c3_i32_77 : i32
      %c3_i32_78 = arith.constant 3 : i32
      %143 = arith.addi %103, %c3_i32_78 : i32
      %c0_i32_79 = arith.constant 0 : i32
      %144 = tpu.memref_slice %arg3[%141, %c0_i32_79] : memref<128x128xf32, #tpu.memory_space<any>> -> memref<1x128xf32, #tpu.memory_space<any>>
      %c0_i32_80 = arith.constant 0 : i32
      %145 = tpu.memref_slice %arg8[%142, %c0_i32_80] : memref<16x128xf32, #tpu.memory_space<vmem>> -> memref<1x128xf32, #tpu.memory_space<vmem>>
      %146 = tpu.memref_slice %arg9[%143] : memref<16x!tpu.dma_semaphore, #tpu.memory_space<semaphore_mem>> -> memref<1x!tpu.dma_semaphore, #tpu.memory_space<semaphore_mem>>
      %147 = tpu.memref_squeeze %146 : memref<1x!tpu.dma_semaphore, #tpu.memory_space<semaphore_mem>> -> memref<!tpu.dma_semaphore, #tpu.memory_space<semaphore_mem>>
      tpu.enqueue_dma source(%144 : memref<1x128xf32, #tpu.memory_space<any>>) target(%145 : memref<1x128xf32, #tpu.memory_space<vmem>>) target_semaphore(%147 : memref<!tpu.dma_semaphore, #tpu.memory_space<semaphore_mem>>)
      %c8_i32_81 = arith.constant 8 : i32
      %148 = arith.muli %arg1, %c8_i32_81 : i32
      %c4_i32_82 = arith.constant 4 : i32
      %149 = arith.addi %148, %c4_i32_82 : i32
      %150 = arith.index_cast %arg0 : i32 to index
      %151 = arith.index_cast %149 : i32 to index
      %152 = memref.load %arg2[%150, %151] : memref<2x16xi32, #tpu.memory_space<smem>>
      %c4_i32_83 = arith.constant 4 : i32
      %153 = arith.addi %103, %c4_i32_83 : i32
      %c4_i32_84 = arith.constant 4 : i32
      %154 = arith.addi %103, %c4_i32_84 : i32
      %c0_i32_85 = arith.constant 0 : i32
      %155 = tpu.memref_slice %arg3[%152, %c0_i32_85] : memref<128x128xf32, #tpu.memory_space<any>> -> memref<1x128xf32, #tpu.memory_space<any>>
      %c0_i32_86 = arith.constant 0 : i32
      %156 = tpu.memref_slice %arg8[%153, %c0_i32_86] : memref<16x128xf32, #tpu.memory_space<vmem>> -> memref<1x128xf32, #tpu.memory_space<vmem>>
      %157 = tpu.memref_slice %arg9[%154] : memref<16x!tpu.dma_semaphore, #tpu.memory_space<semaphore_mem>> -> memref<1x!tpu.dma_semaphore, #tpu.memory_space<semaphore_mem>>
      %158 = tpu.memref_squeeze %157 : memref<1x!tpu.dma_semaphore, #tpu.memory_space<semaphore_mem>> -> memref<!tpu.dma_semaphore, #tpu.memory_space<semaphore_mem>>
      tpu.enqueue_dma source(%155 : memref<1x128xf32, #tpu.memory_space<any>>) target(%156 : memref<1x128xf32, #tpu.memory_space<vmem>>) target_semaphore(%158 : memref<!tpu.dma_semaphore, #tpu.memory_space<semaphore_mem>>)
      %c8_i32_87 = arith.constant 8 : i32
      %159 = arith.muli %arg1, %c8_i32_87 : i32
      %c5_i32_88 = arith.constant 5 : i32
      %160 = arith.addi %159, %c5_i32_88 : i32
      %161 = arith.index_cast %arg0 : i32 to index
      %162 = arith.index_cast %160 : i32 to index
      %163 = memref.load %arg2[%161, %162] : memref<2x16xi32, #tpu.memory_space<smem>>
      %c5_i32_89 = arith.constant 5 : i32
      %164 = arith.addi %103, %c5_i32_89 : i32
      %c5_i32_90 = arith.constant 5 : i32
      %165 = arith.addi %103, %c5_i32_90 : i32
      %c0_i32_91 = arith.constant 0 : i32
      %166 = tpu.memref_slice %arg3[%163, %c0_i32_91] : memref<128x128xf32, #tpu.memory_space<any>> -> memref<1x128xf32, #tpu.memory_space<any>>
      %c0_i32_92 = arith.constant 0 : i32
      %167 = tpu.memref_slice %arg8[%164, %c0_i32_92] : memref<16x128xf32, #tpu.memory_space<vmem>> -> memref<1x128xf32, #tpu.memory_space<vmem>>
      %168 = tpu.memref_slice %arg9[%165] : memref<16x!tpu.dma_semaphore, #tpu.memory_space<semaphore_mem>> -> memref<1x!tpu.dma_semaphore, #tpu.memory_space<semaphore_mem>>
      %169 = tpu.memref_squeeze %168 : memref<1x!tpu.dma_semaphore, #tpu.memory_space<semaphore_mem>> -> memref<!tpu.dma_semaphore, #tpu.memory_space<semaphore_mem>>
      tpu.enqueue_dma source(%166 : memref<1x128xf32, #tpu.memory_space<any>>) target(%167 : memref<1x128xf32, #tpu.memory_space<vmem>>) target_semaphore(%169 : memref<!tpu.dma_semaphore, #tpu.memory_space<semaphore_mem>>)
      %c8_i32_93 = arith.constant 8 : i32
      %170 = arith.muli %arg1, %c8_i32_93 : i32
      %c6_i32_94 = arith.constant 6 : i32
      %171 = arith.addi %170, %c6_i32_94 : i32
      %172 = arith.index_cast %arg0 : i32 to index
      %173 = arith.index_cast %171 : i32 to index
      %174 = memref.load %arg2[%172, %173] : memref<2x16xi32, #tpu.memory_space<smem>>
      %c6_i32_95 = arith.constant 6 : i32
      %175 = arith.addi %103, %c6_i32_95 : i32
      %c6_i32_96 = arith.constant 6 : i32
      %176 = arith.addi %103, %c6_i32_96 : i32
      %c0_i32_97 = arith.constant 0 : i32
      %177 = tpu.memref_slice %arg3[%174, %c0_i32_97] : memref<128x128xf32, #tpu.memory_space<any>> -> memref<1x128xf32, #tpu.memory_space<any>>
      %c0_i32_98 = arith.constant 0 : i32
      %178 = tpu.memref_slice %arg8[%175, %c0_i32_98] : memref<16x128xf32, #tpu.memory_space<vmem>> -> memref<1x128xf32, #tpu.memory_space<vmem>>
      %179 = tpu.memref_slice %arg9[%176] : memref<16x!tpu.dma_semaphore, #tpu.memory_space<semaphore_mem>> -> memref<1x!tpu.dma_semaphore, #tpu.memory_space<semaphore_mem>>
      %180 = tpu.memref_squeeze %179 : memref<1x!tpu.dma_semaphore, #tpu.memory_space<semaphore_mem>> -> memref<!tpu.dma_semaphore, #tpu.memory_space<semaphore_mem>>
      tpu.enqueue_dma source(%177 : memref<1x128xf32, #tpu.memory_space<any>>) target(%178 : memref<1x128xf32, #tpu.memory_space<vmem>>) target_semaphore(%180 : memref<!tpu.dma_semaphore, #tpu.memory_space<semaphore_mem>>)
      %c8_i32_99 = arith.constant 8 : i32
      %181 = arith.muli %arg1, %c8_i32_99 : i32
      %c7_i32_100 = arith.constant 7 : i32
      %182 = arith.addi %181, %c7_i32_100 : i32
      %183 = arith.index_cast %arg0 : i32 to index
      %184 = arith.index_cast %182 : i32 to index
      %185 = memref.load %arg2[%183, %184] : memref<2x16xi32, #tpu.memory_space<smem>>
      %c7_i32_101 = arith.constant 7 : i32
      %186 = arith.addi %103, %c7_i32_101 : i32
      %c7_i32_102 = arith.constant 7 : i32
      %187 = arith.addi %103, %c7_i32_102 : i32
      %c0_i32_103 = arith.constant 0 : i32
      %188 = tpu.memref_slice %arg3[%185, %c0_i32_103] : memref<128x128xf32, #tpu.memory_space<any>> -> memref<1x128xf32, #tpu.memory_space<any>>
      %c0_i32_104 = arith.constant 0 : i32
      %189 = tpu.memref_slice %arg8[%186, %c0_i32_104] : memref<16x128xf32, #tpu.memory_space<vmem>> -> memref<1x128xf32, #tpu.memory_space<vmem>>
      %190 = tpu.memref_slice %arg9[%187] : memref<16x!tpu.dma_semaphore, #tpu.memory_space<semaphore_mem>> -> memref<1x!tpu.dma_semaphore, #tpu.memory_space<semaphore_mem>>
      %191 = tpu.memref_squeeze %190 : memref<1x!tpu.dma_semaphore, #tpu.memory_space<semaphore_mem>> -> memref<!tpu.dma_semaphore, #tpu.memory_space<semaphore_mem>>
      tpu.enqueue_dma source(%188 : memref<1x128xf32, #tpu.memory_space<any>>) target(%189 : memref<1x128xf32, #tpu.memory_space<vmem>>) target_semaphore(%191 : memref<!tpu.dma_semaphore, #tpu.memory_space<semaphore_mem>>)
    } else {
    }
    %c1_i32_6 = arith.constant 1 : i32
    %14 = arith.addi %arg1, %c1_i32_6 : i32
    %c2_i32_7 = arith.constant 2 : i32
    %15 = arith.cmpi slt, %14, %c2_i32_7 : i32
    %16 = arith.extui %15 : i1 to i32
    %c0_i32_8 = arith.constant 0 : i32
    %17 = arith.cmpi ne, %16, %c0_i32_8 : i32
    scf.if %17 {
      %c1_i32_56 = arith.constant 1 : i32
      %102 = arith.addi %arg1, %c1_i32_56 : i32
      %c8_i32_57 = arith.constant 8 : i32
      %103 = arith.muli %10, %c8_i32_57 : i32
      %104 = tpu.assume_multiple %103, 8 : i32
      %c8_i32_58 = arith.constant 8 : i32
      %105 = arith.muli %102, %c8_i32_58 : i32
      %c0_i32_59 = arith.constant 0 : i32
      %106 = arith.addi %105, %c0_i32_59 : i32
      %107 = arith.index_cast %arg0 : i32 to index
      %108 = arith.index_cast %106 : i32 to index
      %109 = memref.load %arg2[%107, %108] : memref<2x16xi32, #tpu.memory_space<smem>>
      %c0_i32_60 = arith.constant 0 : i32
      %110 = arith.addi %104, %c0_i32_60 : i32
      %c0_i32_61 = arith.constant 0 : i32
      %111 = arith.addi %104, %c0_i32_61 : i32
      %c0_i32_62 = arith.constant 0 : i32
      %112 = tpu.memref_slice %arg3[%109, %c0_i32_62] : memref<128x128xf32, #tpu.memory_space<any>> -> memref<1x128xf32, #tpu.memory_space<any>>
      %c0_i32_63 = arith.constant 0 : i32
      %113 = tpu.memref_slice %arg8[%110, %c0_i32_63] : memref<16x128xf32, #tpu.memory_space<vmem>> -> memref<1x128xf32, #tpu.memory_space<vmem>>
      %114 = tpu.memref_slice %arg9[%111] : memref<16x!tpu.dma_semaphore, #tpu.memory_space<semaphore_mem>> -> memref<1x!tpu.dma_semaphore, #tpu.memory_space<semaphore_mem>>
      %115 = tpu.memref_squeeze %114 : memref<1x!tpu.dma_semaphore, #tpu.memory_space<semaphore_mem>> -> memref<!tpu.dma_semaphore, #tpu.memory_space<semaphore_mem>>
      tpu.enqueue_dma source(%112 : memref<1x128xf32, #tpu.memory_space<any>>) target(%113 : memref<1x128xf32, #tpu.memory_space<vmem>>) target_semaphore(%115 : memref<!tpu.dma_semaphore, #tpu.memory_space<semaphore_mem>>)
      %c8_i32_64 = arith.constant 8 : i32
      %116 = arith.muli %102, %c8_i32_64 : i32
      %c1_i32_65 = arith.constant 1 : i32
      %117 = arith.addi %116, %c1_i32_65 : i32
      %118 = arith.index_cast %arg0 : i32 to index
      %119 = arith.index_cast %117 : i32 to index
      %120 = memref.load %arg2[%118, %119] : memref<2x16xi32, #tpu.memory_space<smem>>
      %c1_i32_66 = arith.constant 1 : i32
      %121 = arith.addi %104, %c1_i32_66 : i32
      %c1_i32_67 = arith.constant 1 : i32
      %122 = arith.addi %104, %c1_i32_67 : i32
      %c0_i32_68 = arith.constant 0 : i32
      %123 = tpu.memref_slice %arg3[%120, %c0_i32_68] : memref<128x128xf32, #tpu.memory_space<any>> -> memref<1x128xf32, #tpu.memory_space<any>>
      %c0_i32_69 = arith.constant 0 : i32
      %124 = tpu.memref_slice %arg8[%121, %c0_i32_69] : memref<16x128xf32, #tpu.memory_space<vmem>> -> memref<1x128xf32, #tpu.memory_space<vmem>>
      %125 = tpu.memref_slice %arg9[%122] : memref<16x!tpu.dma_semaphore, #tpu.memory_space<semaphore_mem>> -> memref<1x!tpu.dma_semaphore, #tpu.memory_space<semaphore_mem>>
      %126 = tpu.memref_squeeze %125 : memref<1x!tpu.dma_semaphore, #tpu.memory_space<semaphore_mem>> -> memref<!tpu.dma_semaphore, #tpu.memory_space<semaphore_mem>>
      tpu.enqueue_dma source(%123 : memref<1x128xf32, #tpu.memory_space<any>>) target(%124 : memref<1x128xf32, #tpu.memory_space<vmem>>) target_semaphore(%126 : memref<!tpu.dma_semaphore, #tpu.memory_space<semaphore_mem>>)
      %c8_i32_70 = arith.constant 8 : i32
      %127 = arith.muli %102, %c8_i32_70 : i32
      %c2_i32_71 = arith.constant 2 : i32
      %128 = arith.addi %127, %c2_i32_71 : i32
      %129 = arith.index_cast %arg0 : i32 to index
      %130 = arith.index_cast %128 : i32 to index
      %131 = memref.load %arg2[%129, %130] : memref<2x16xi32, #tpu.memory_space<smem>>
      %c2_i32_72 = arith.constant 2 : i32
      %132 = arith.addi %104, %c2_i32_72 : i32
      %c2_i32_73 = arith.constant 2 : i32
      %133 = arith.addi %104, %c2_i32_73 : i32
      %c0_i32_74 = arith.constant 0 : i32
      %134 = tpu.memref_slice %arg3[%131, %c0_i32_74] : memref<128x128xf32, #tpu.memory_space<any>> -> memref<1x128xf32, #tpu.memory_space<any>>
      %c0_i32_75 = arith.constant 0 : i32
      %135 = tpu.memref_slice %arg8[%132, %c0_i32_75] : memref<16x128xf32, #tpu.memory_space<vmem>> -> memref<1x128xf32, #tpu.memory_space<vmem>>
      %136 = tpu.memref_slice %arg9[%133] : memref<16x!tpu.dma_semaphore, #tpu.memory_space<semaphore_mem>> -> memref<1x!tpu.dma_semaphore, #tpu.memory_space<semaphore_mem>>
      %137 = tpu.memref_squeeze %136 : memref<1x!tpu.dma_semaphore, #tpu.memory_space<semaphore_mem>> -> memref<!tpu.dma_semaphore, #tpu.memory_space<semaphore_mem>>
      tpu.enqueue_dma source(%134 : memref<1x128xf32, #tpu.memory_space<any>>) target(%135 : memref<1x128xf32, #tpu.memory_space<vmem>>) target_semaphore(%137 : memref<!tpu.dma_semaphore, #tpu.memory_space<semaphore_mem>>)
      %c8_i32_76 = arith.constant 8 : i32
      %138 = arith.muli %102, %c8_i32_76 : i32
      %c3_i32_77 = arith.constant 3 : i32
      %139 = arith.addi %138, %c3_i32_77 : i32
      %140 = arith.index_cast %arg0 : i32 to index
      %141 = arith.index_cast %139 : i32 to index
      %142 = memref.load %arg2[%140, %141] : memref<2x16xi32, #tpu.memory_space<smem>>
      %c3_i32_78 = arith.constant 3 : i32
      %143 = arith.addi %104, %c3_i32_78 : i32
      %c3_i32_79 = arith.constant 3 : i32
      %144 = arith.addi %104, %c3_i32_79 : i32
      %c0_i32_80 = arith.constant 0 : i32
      %145 = tpu.memref_slice %arg3[%142, %c0_i32_80] : memref<128x128xf32, #tpu.memory_space<any>> -> memref<1x128xf32, #tpu.memory_space<any>>
      %c0_i32_81 = arith.constant 0 : i32
      %146 = tpu.memref_slice %arg8[%143, %c0_i32_81] : memref<16x128xf32, #tpu.memory_space<vmem>> -> memref<1x128xf32, #tpu.memory_space<vmem>>
      %147 = tpu.memref_slice %arg9[%144] : memref<16x!tpu.dma_semaphore, #tpu.memory_space<semaphore_mem>> -> memref<1x!tpu.dma_semaphore, #tpu.memory_space<semaphore_mem>>
      %148 = tpu.memref_squeeze %147 : memref<1x!tpu.dma_semaphore, #tpu.memory_space<semaphore_mem>> -> memref<!tpu.dma_semaphore, #tpu.memory_space<semaphore_mem>>
      tpu.enqueue_dma source(%145 : memref<1x128xf32, #tpu.memory_space<any>>) target(%146 : memref<1x128xf32, #tpu.memory_space<vmem>>) target_semaphore(%148 : memref<!tpu.dma_semaphore, #tpu.memory_space<semaphore_mem>>)
      %c8_i32_82 = arith.constant 8 : i32
      %149 = arith.muli %102, %c8_i32_82 : i32
      %c4_i32_83 = arith.constant 4 : i32
      %150 = arith.addi %149, %c4_i32_83 : i32
      %151 = arith.index_cast %arg0 : i32 to index
      %152 = arith.index_cast %150 : i32 to index
      %153 = memref.load %arg2[%151, %152] : memref<2x16xi32, #tpu.memory_space<smem>>
      %c4_i32_84 = arith.constant 4 : i32
      %154 = arith.addi %104, %c4_i32_84 : i32
      %c4_i32_85 = arith.constant 4 : i32
      %155 = arith.addi %104, %c4_i32_85 : i32
      %c0_i32_86 = arith.constant 0 : i32
      %156 = tpu.memref_slice %arg3[%153, %c0_i32_86] : memref<128x128xf32, #tpu.memory_space<any>> -> memref<1x128xf32, #tpu.memory_space<any>>
      %c0_i32_87 = arith.constant 0 : i32
      %157 = tpu.memref_slice %arg8[%154, %c0_i32_87] : memref<16x128xf32, #tpu.memory_space<vmem>> -> memref<1x128xf32, #tpu.memory_space<vmem>>
      %158 = tpu.memref_slice %arg9[%155] : memref<16x!tpu.dma_semaphore, #tpu.memory_space<semaphore_mem>> -> memref<1x!tpu.dma_semaphore, #tpu.memory_space<semaphore_mem>>
      %159 = tpu.memref_squeeze %158 : memref<1x!tpu.dma_semaphore, #tpu.memory_space<semaphore_mem>> -> memref<!tpu.dma_semaphore, #tpu.memory_space<semaphore_mem>>
      tpu.enqueue_dma source(%156 : memref<1x128xf32, #tpu.memory_space<any>>) target(%157 : memref<1x128xf32, #tpu.memory_space<vmem>>) target_semaphore(%159 : memref<!tpu.dma_semaphore, #tpu.memory_space<semaphore_mem>>)
      %c8_i32_88 = arith.constant 8 : i32
      %160 = arith.muli %102, %c8_i32_88 : i32
      %c5_i32_89 = arith.constant 5 : i32
      %161 = arith.addi %160, %c5_i32_89 : i32
      %162 = arith.index_cast %arg0 : i32 to index
      %163 = arith.index_cast %161 : i32 to index
      %164 = memref.load %arg2[%162, %163] : memref<2x16xi32, #tpu.memory_space<smem>>
      %c5_i32_90 = arith.constant 5 : i32
      %165 = arith.addi %104, %c5_i32_90 : i32
      %c5_i32_91 = arith.constant 5 : i32
      %166 = arith.addi %104, %c5_i32_91 : i32
      %c0_i32_92 = arith.constant 0 : i32
      %167 = tpu.memref_slice %arg3[%164, %c0_i32_92] : memref<128x128xf32, #tpu.memory_space<any>> -> memref<1x128xf32, #tpu.memory_space<any>>
      %c0_i32_93 = arith.constant 0 : i32
      %168 = tpu.memref_slice %arg8[%165, %c0_i32_93] : memref<16x128xf32, #tpu.memory_space<vmem>> -> memref<1x128xf32, #tpu.memory_space<vmem>>
      %169 = tpu.memref_slice %arg9[%166] : memref<16x!tpu.dma_semaphore, #tpu.memory_space<semaphore_mem>> -> memref<1x!tpu.dma_semaphore, #tpu.memory_space<semaphore_mem>>
      %170 = tpu.memref_squeeze %169 : memref<1x!tpu.dma_semaphore, #tpu.memory_space<semaphore_mem>> -> memref<!tpu.dma_semaphore, #tpu.memory_space<semaphore_mem>>
      tpu.enqueue_dma source(%167 : memref<1x128xf32, #tpu.memory_space<any>>) target(%168 : memref<1x128xf32, #tpu.memory_space<vmem>>) target_semaphore(%170 : memref<!tpu.dma_semaphore, #tpu.memory_space<semaphore_mem>>)
      %c8_i32_94 = arith.constant 8 : i32
      %171 = arith.muli %102, %c8_i32_94 : i32
      %c6_i32_95 = arith.constant 6 : i32
      %172 = arith.addi %171, %c6_i32_95 : i32
      %173 = arith.index_cast %arg0 : i32 to index
      %174 = arith.index_cast %172 : i32 to index
      %175 = memref.load %arg2[%173, %174] : memref<2x16xi32, #tpu.memory_space<smem>>
      %c6_i32_96 = arith.constant 6 : i32
      %176 = arith.addi %104, %c6_i32_96 : i32
      %c6_i32_97 = arith.constant 6 : i32
      %177 = arith.addi %104, %c6_i32_97 : i32
      %c0_i32_98 = arith.constant 0 : i32
      %178 = tpu.memref_slice %arg3[%175, %c0_i32_98] : memref<128x128xf32, #tpu.memory_space<any>> -> memref<1x128xf32, #tpu.memory_space<any>>
      %c0_i32_99 = arith.constant 0 : i32
      %179 = tpu.memref_slice %arg8[%176, %c0_i32_99] : memref<16x128xf32, #tpu.memory_space<vmem>> -> memref<1x128xf32, #tpu.memory_space<vmem>>
      %180 = tpu.memref_slice %arg9[%177] : memref<16x!tpu.dma_semaphore, #tpu.memory_space<semaphore_mem>> -> memref<1x!tpu.dma_semaphore, #tpu.memory_space<semaphore_mem>>
      %181 = tpu.memref_squeeze %180 : memref<1x!tpu.dma_semaphore, #tpu.memory_space<semaphore_mem>> -> memref<!tpu.dma_semaphore, #tpu.memory_space<semaphore_mem>>
      tpu.enqueue_dma source(%178 : memref<1x128xf32, #tpu.memory_space<any>>) target(%179 : memref<1x128xf32, #tpu.memory_space<vmem>>) target_semaphore(%181 : memref<!tpu.dma_semaphore, #tpu.memory_space<semaphore_mem>>)
      %c8_i32_100 = arith.constant 8 : i32
      %182 = arith.muli %102, %c8_i32_100 : i32
      %c7_i32_101 = arith.constant 7 : i32
      %183 = arith.addi %182, %c7_i32_101 : i32
      %184 = arith.index_cast %arg0 : i32 to index
      %185 = arith.index_cast %183 : i32 to index
      %186 = memref.load %arg2[%184, %185] : memref<2x16xi32, #tpu.memory_space<smem>>
      %c7_i32_102 = arith.constant 7 : i32
      %187 = arith.addi %104, %c7_i32_102 : i32
      %c7_i32_103 = arith.constant 7 : i32
      %188 = arith.addi %104, %c7_i32_103 : i32
      %c0_i32_104 = arith.constant 0 : i32
      %189 = tpu.memref_slice %arg3[%186, %c0_i32_104] : memref<128x128xf32, #tpu.memory_space<any>> -> memref<1x128xf32, #tpu.memory_space<any>>
      %c0_i32_105 = arith.constant 0 : i32
      %190 = tpu.memref_slice %arg8[%187, %c0_i32_105] : memref<16x128xf32, #tpu.memory_space<vmem>> -> memref<1x128xf32, #tpu.memory_space<vmem>>
      %191 = tpu.memref_slice %arg9[%188] : memref<16x!tpu.dma_semaphore, #tpu.memory_space<semaphore_mem>> -> memref<1x!tpu.dma_semaphore, #tpu.memory_space<semaphore_mem>>
      %192 = tpu.memref_squeeze %191 : memref<1x!tpu.dma_semaphore, #tpu.memory_space<semaphore_mem>> -> memref<!tpu.dma_semaphore, #tpu.memory_space<semaphore_mem>>
      tpu.enqueue_dma source(%189 : memref<1x128xf32, #tpu.memory_space<any>>) target(%190 : memref<1x128xf32, #tpu.memory_space<vmem>>) target_semaphore(%192 : memref<!tpu.dma_semaphore, #tpu.memory_space<semaphore_mem>>)
    } else {
    }
    %c8_i32 = arith.constant 8 : i32
    %18 = arith.muli %9, %c8_i32 : i32
    %19 = tpu.assume_multiple %18, 8 : i32
    %c0_i32_9 = arith.constant 0 : i32
    %20 = arith.addi %19, %c0_i32_9 : i32
    %c0_i32_10 = arith.constant 0 : i32
    %21 = arith.addi %19, %c0_i32_10 : i32
    %c0_i32_11 = arith.constant 0 : i32
    %c0_i32_12 = arith.constant 0 : i32
    %22 = tpu.memref_slice %arg3[%c0_i32_11, %c0_i32_12] : memref<128x128xf32, #tpu.memory_space<any>> -> memref<1x128xf32, #tpu.memory_space<any>>
    %c0_i32_13 = arith.constant 0 : i32
    %23 = tpu.memref_slice %arg8[%20, %c0_i32_13] : memref<16x128xf32, #tpu.memory_space<vmem>> -> memref<1x128xf32, #tpu.memory_space<vmem>>
    %24 = tpu.memref_slice %arg9[%21] : memref<16x!tpu.dma_semaphore, #tpu.memory_space<semaphore_mem>> -> memref<1x!tpu.dma_semaphore, #tpu.memory_space<semaphore_mem>>
    %25 = tpu.memref_squeeze %24 : memref<1x!tpu.dma_semaphore, #tpu.memory_space<semaphore_mem>> -> memref<!tpu.dma_semaphore, #tpu.memory_space<semaphore_mem>>
    tpu.wait_dma2 semaphore(%25 : memref<!tpu.dma_semaphore, #tpu.memory_space<semaphore_mem>>) src(%22 : memref<1x128xf32, #tpu.memory_space<any>>) dst(%23 : memref<1x128xf32, #tpu.memory_space<vmem>>)
    %c1_i32_14 = arith.constant 1 : i32
    %26 = arith.addi %19, %c1_i32_14 : i32
    %c1_i32_15 = arith.constant 1 : i32
    %27 = arith.addi %19, %c1_i32_15 : i32
    %c0_i32_16 = arith.constant 0 : i32
    %c0_i32_17 = arith.constant 0 : i32
    %28 = tpu.memref_slice %arg3[%c0_i32_16, %c0_i32_17] : memref<128x128xf32, #tpu.memory_space<any>> -> memref<1x128xf32, #tpu.memory_space<any>>
    %c0_i32_18 = arith.constant 0 : i32
    %29 = tpu.memref_slice %arg8[%26, %c0_i32_18] : memref<16x128xf32, #tpu.memory_space<vmem>> -> memref<1x128xf32, #tpu.memory_space<vmem>>
    %30 = tpu.memref_slice %arg9[%27] : memref<16x!tpu.dma_semaphore, #tpu.memory_space<semaphore_mem>> -> memref<1x!tpu.dma_semaphore, #tpu.memory_space<semaphore_mem>>
    %31 = tpu.memref_squeeze %30 : memref<1x!tpu.dma_semaphore, #tpu.memory_space<semaphore_mem>> -> memref<!tpu.dma_semaphore, #tpu.memory_space<semaphore_mem>>
    tpu.wait_dma2 semaphore(%31 : memref<!tpu.dma_semaphore, #tpu.memory_space<semaphore_mem>>) src(%28 : memref<1x128xf32, #tpu.memory_space<any>>) dst(%29 : memref<1x128xf32, #tpu.memory_space<vmem>>)
    %c2_i32_19 = arith.constant 2 : i32
    %32 = arith.addi %19, %c2_i32_19 : i32
    %c2_i32_20 = arith.constant 2 : i32
    %33 = arith.addi %19, %c2_i32_20 : i32
    %c0_i32_21 = arith.constant 0 : i32
    %c0_i32_22 = arith.constant 0 : i32
    %34 = tpu.memref_slice %arg3[%c0_i32_21, %c0_i32_22] : memref<128x128xf32, #tpu.memory_space<any>> -> memref<1x128xf32, #tpu.memory_space<any>>
    %c0_i32_23 = arith.constant 0 : i32
    %35 = tpu.memref_slice %arg8[%32, %c0_i32_23] : memref<16x128xf32, #tpu.memory_space<vmem>> -> memref<1x128xf32, #tpu.memory_space<vmem>>
    %36 = tpu.memref_slice %arg9[%33] : memref<16x!tpu.dma_semaphore, #tpu.memory_space<semaphore_mem>> -> memref<1x!tpu.dma_semaphore, #tpu.memory_space<semaphore_mem>>
    %37 = tpu.memref_squeeze %36 : memref<1x!tpu.dma_semaphore, #tpu.memory_space<semaphore_mem>> -> memref<!tpu.dma_semaphore, #tpu.memory_space<semaphore_mem>>
    tpu.wait_dma2 semaphore(%37 : memref<!tpu.dma_semaphore, #tpu.memory_space<semaphore_mem>>) src(%34 : memref<1x128xf32, #tpu.memory_space<any>>) dst(%35 : memref<1x128xf32, #tpu.memory_space<vmem>>)
    %c3_i32 = arith.constant 3 : i32
    %38 = arith.addi %19, %c3_i32 : i32
    %c3_i32_24 = arith.constant 3 : i32
    %39 = arith.addi %19, %c3_i32_24 : i32
    %c0_i32_25 = arith.constant 0 : i32
    %c0_i32_26 = arith.constant 0 : i32
    %40 = tpu.memref_slice %arg3[%c0_i32_25, %c0_i32_26] : memref<128x128xf32, #tpu.memory_space<any>> -> memref<1x128xf32, #tpu.memory_space<any>>
    %c0_i32_27 = arith.constant 0 : i32
    %41 = tpu.memref_slice %arg8[%38, %c0_i32_27] : memref<16x128xf32, #tpu.memory_space<vmem>> -> memref<1x128xf32, #tpu.memory_space<vmem>>
    %42 = tpu.memref_slice %arg9[%39] : memref<16x!tpu.dma_semaphore, #tpu.memory_space<semaphore_mem>> -> memref<1x!tpu.dma_semaphore, #tpu.memory_space<semaphore_mem>>
    %43 = tpu.memref_squeeze %42 : memref<1x!tpu.dma_semaphore, #tpu.memory_space<semaphore_mem>> -> memref<!tpu.dma_semaphore, #tpu.memory_space<semaphore_mem>>
    tpu.wait_dma2 semaphore(%43 : memref<!tpu.dma_semaphore, #tpu.memory_space<semaphore_mem>>) src(%40 : memref<1x128xf32, #tpu.memory_space<any>>) dst(%41 : memref<1x128xf32, #tpu.memory_space<vmem>>)
    %c4_i32 = arith.constant 4 : i32
    %44 = arith.addi %19, %c4_i32 : i32
    %c4_i32_28 = arith.constant 4 : i32
    %45 = arith.addi %19, %c4_i32_28 : i32
    %c0_i32_29 = arith.constant 0 : i32
    %c0_i32_30 = arith.constant 0 : i32
    %46 = tpu.memref_slice %arg3[%c0_i32_29, %c0_i32_30] : memref<128x128xf32, #tpu.memory_space<any>> -> memref<1x128xf32, #tpu.memory_space<any>>
    %c0_i32_31 = arith.constant 0 : i32
    %47 = tpu.memref_slice %arg8[%44, %c0_i32_31] : memref<16x128xf32, #tpu.memory_space<vmem>> -> memref<1x128xf32, #tpu.memory_space<vmem>>
    %48 = tpu.memref_slice %arg9[%45] : memref<16x!tpu.dma_semaphore, #tpu.memory_space<semaphore_mem>> -> memref<1x!tpu.dma_semaphore, #tpu.memory_space<semaphore_mem>>
    %49 = tpu.memref_squeeze %48 : memref<1x!tpu.dma_semaphore, #tpu.memory_space<semaphore_mem>> -> memref<!tpu.dma_semaphore, #tpu.memory_space<semaphore_mem>>
    tpu.wait_dma2 semaphore(%49 : memref<!tpu.dma_semaphore, #tpu.memory_space<semaphore_mem>>) src(%46 : memref<1x128xf32, #tpu.memory_space<any>>) dst(%47 : memref<1x128xf32, #tpu.memory_space<vmem>>)
    %c5_i32 = arith.constant 5 : i32
    %50 = arith.addi %19, %c5_i32 : i32
    %c5_i32_32 = arith.constant 5 : i32
    %51 = arith.addi %19, %c5_i32_32 : i32
    %c0_i32_33 = arith.constant 0 : i32
    %c0_i32_34 = arith.constant 0 : i32
    %52 = tpu.memref_slice %arg3[%c0_i32_33, %c0_i32_34] : memref<128x128xf32, #tpu.memory_space<any>> -> memref<1x128xf32, #tpu.memory_space<any>>
    %c0_i32_35 = arith.constant 0 : i32
    %53 = tpu.memref_slice %arg8[%50, %c0_i32_35] : memref<16x128xf32, #tpu.memory_space<vmem>> -> memref<1x128xf32, #tpu.memory_space<vmem>>
    %54 = tpu.memref_slice %arg9[%51] : memref<16x!tpu.dma_semaphore, #tpu.memory_space<semaphore_mem>> -> memref<1x!tpu.dma_semaphore, #tpu.memory_space<semaphore_mem>>
    %55 = tpu.memref_squeeze %54 : memref<1x!tpu.dma_semaphore, #tpu.memory_space<semaphore_mem>> -> memref<!tpu.dma_semaphore, #tpu.memory_space<semaphore_mem>>
    tpu.wait_dma2 semaphore(%55 : memref<!tpu.dma_semaphore, #tpu.memory_space<semaphore_mem>>) src(%52 : memref<1x128xf32, #tpu.memory_space<any>>) dst(%53 : memref<1x128xf32, #tpu.memory_space<vmem>>)
    %c6_i32 = arith.constant 6 : i32
    %56 = arith.addi %19, %c6_i32 : i32
    %c6_i32_36 = arith.constant 6 : i32
    %57 = arith.addi %19, %c6_i32_36 : i32
    %c0_i32_37 = arith.constant 0 : i32
    %c0_i32_38 = arith.constant 0 : i32
    %58 = tpu.memref_slice %arg3[%c0_i32_37, %c0_i32_38] : memref<128x128xf32, #tpu.memory_space<any>> -> memref<1x128xf32, #tpu.memory_space<any>>
    %c0_i32_39 = arith.constant 0 : i32
    %59 = tpu.memref_slice %arg8[%56, %c0_i32_39] : memref<16x128xf32, #tpu.memory_space<vmem>> -> memref<1x128xf32, #tpu.memory_space<vmem>>
    %60 = tpu.memref_slice %arg9[%57] : memref<16x!tpu.dma_semaphore, #tpu.memory_space<semaphore_mem>> -> memref<1x!tpu.dma_semaphore, #tpu.memory_space<semaphore_mem>>
    %61 = tpu.memref_squeeze %60 : memref<1x!tpu.dma_semaphore, #tpu.memory_space<semaphore_mem>> -> memref<!tpu.dma_semaphore, #tpu.memory_space<semaphore_mem>>
    tpu.wait_dma2 semaphore(%61 : memref<!tpu.dma_semaphore, #tpu.memory_space<semaphore_mem>>) src(%58 : memref<1x128xf32, #tpu.memory_space<any>>) dst(%59 : memref<1x128xf32, #tpu.memory_space<vmem>>)
    %c7_i32 = arith.constant 7 : i32
    %62 = arith.addi %19, %c7_i32 : i32
    %c7_i32_40 = arith.constant 7 : i32
    %63 = arith.addi %19, %c7_i32_40 : i32
    %c0_i32_41 = arith.constant 0 : i32
    %c0_i32_42 = arith.constant 0 : i32
    %64 = tpu.memref_slice %arg3[%c0_i32_41, %c0_i32_42] : memref<128x128xf32, #tpu.memory_space<any>> -> memref<1x128xf32, #tpu.memory_space<any>>
    %c0_i32_43 = arith.constant 0 : i32
    %65 = tpu.memref_slice %arg8[%62, %c0_i32_43] : memref<16x128xf32, #tpu.memory_space<vmem>> -> memref<1x128xf32, #tpu.memory_space<vmem>>
    %66 = tpu.memref_slice %arg9[%63] : memref<16x!tpu.dma_semaphore, #tpu.memory_space<semaphore_mem>> -> memref<1x!tpu.dma_semaphore, #tpu.memory_space<semaphore_mem>>
    %67 = tpu.memref_squeeze %66 : memref<1x!tpu.dma_semaphore, #tpu.memory_space<semaphore_mem>> -> memref<!tpu.dma_semaphore, #tpu.memory_space<semaphore_mem>>
    tpu.wait_dma2 semaphore(%67 : memref<!tpu.dma_semaphore, #tpu.memory_space<semaphore_mem>>) src(%64 : memref<1x128xf32, #tpu.memory_space<any>>) dst(%65 : memref<1x128xf32, #tpu.memory_space<vmem>>)
    %68 = arith.index_cast %19 : i32 to index
    %c0 = arith.constant 0 : index
    %69 = vector.load %arg8[%68, %c0] : memref<16x128xf32, #tpu.memory_space<vmem>>, vector<8x128xf32>
    %c0_44 = arith.constant 0 : index
    %c0_45 = arith.constant 0 : index
    %70 = vector.load %arg4[%c0_44, %c0_45] : memref<8x128xf32, #tpu.memory_space<vmem>>, vector<8x128xf32>
    %71 = arith.addf %69, %70 : vector<8x128xf32>
    %cst = arith.constant dense<0.000000e+00> : vector<8xf32>
    %72 = vector.multi_reduction <add>, %71, %cst [1] : vector<8x128xf32> to vector<8xf32>
    %73 = vector.shape_cast %72 : vector<8xf32> to vector<8x1xf32>
    %cst_46 = arith.constant 3.125000e-02 : f32
    %74 = vector.broadcast %cst_46 : f32 to vector<8x1xf32>
    %75 = arith.mulf %73, %74 : vector<8x1xf32>
    %76 = vector.broadcast %75 : vector<8x1xf32> to vector<8x128xf32>
    %77 = arith.subf %71, %76 : vector<8x128xf32>
    %78 = tpu.iota {dimensions = array<i32: 1>} : vector<1x128xi32>
    %c32_i32 = arith.constant 32 : i32
    %79 = vector.broadcast %c32_i32 : i32 to vector<1x128xi32>
    %80 = arith.cmpi slt, %78, %79 : vector<1x128xi32>
    %81 = arith.extui %80 : vector<1x128xi1> to vector<1x128xi32>
    %82 = arith.sitofp %81 : vector<1x128xi32> to vector<1x128xf32>
    %83 = vector.broadcast %82 : vector<1x128xf32> to vector<8x128xf32>
    %84 = arith.mulf %77, %83 : vector<8x128xf32>
    %85 = arith.mulf %84, %84 : vector<8x128xf32>
    %cst_47 = arith.constant dense<0.000000e+00> : vector<8xf32>
    %86 = vector.multi_reduction <add>, %85, %cst_47 [1] : vector<8x128xf32> to vector<8xf32>
    %87 = vector.shape_cast %86 : vector<8xf32> to vector<8x1xf32>
    %cst_48 = arith.constant 3.125000e-02 : f32
    %88 = vector.broadcast %cst_48 : f32 to vector<8x1xf32>
    %89 = arith.mulf %87, %88 : vector<8x1xf32>
    %cst_49 = arith.constant 9.99999996E-13 : f32
    %90 = vector.broadcast %cst_49 : f32 to vector<8x1xf32>
    %91 = arith.addf %89, %90 : vector<8x1xf32>
    %92 = math.rsqrt %91 : vector<8x1xf32>
    %93 = vector.broadcast %92 : vector<8x1xf32> to vector<8x128xf32>
    %94 = arith.mulf %84, %93 : vector<8x128xf32>
    %c0_50 = arith.constant 0 : index
    %c0_51 = arith.constant 0 : index
    %95 = vector.load %arg5[%c0_50, %c0_51] : memref<1x128xf32, #tpu.memory_space<vmem>>, vector<1x128xf32>
    %96 = vector.broadcast %95 : vector<1x128xf32> to vector<8x128xf32>
    %97 = arith.mulf %94, %96 : vector<8x128xf32>
    %c0_52 = arith.constant 0 : index
    %c0_53 = arith.constant 0 : index
    %98 = vector.load %arg6[%c0_52, %c0_53] : memref<1x128xf32, #tpu.memory_space<vmem>>, vector<1x128xf32>
    %99 = vector.broadcast %98 : vector<1x128xf32> to vector<8x128xf32>
    %100 = arith.addf %97, %99 : vector<8x128xf32>
    %c0_54 = arith.constant 0 : index
    %c0_55 = arith.constant 0 : index
    %101 = vector.load %arg7[%c0_54, %c0_55] : memref<8x128xf32, #tpu.memory_space<vmem>>, vector<8x128xf32>
    tpu.vector_store %arg7[%c0_54, %c0_55], %100 {strides = array<i32>} : memref<8x128xf32, #tpu.memory_space<vmem>>, vector<8x128xf32>,
    return
  }
  func.func @transform_1(%arg0: i32, %arg1: i32, %arg2: memref<2x16xi32, #tpu.memory_space<smem>>) -> (i32, i32) {
    %c0_i32 = arith.constant 0 : i32
    %c0_i32_0 = arith.constant 0 : i32
    return %arg1, %c0_i32 : i32, i32
  }
  func.func @transform_2(%arg0: i32, %arg1: i32, %arg2: memref<2x16xi32, #tpu.memory_space<smem>>) -> (i32, i32) {
    %c0_i32 = arith.constant 0 : i32
    %c0_i32_0 = arith.constant 0 : i32
    %c0_i32_1 = arith.constant 0 : i32
    return %c0_i32, %c0_i32_0 : i32, i32
  }
  func.func @transform_3(%arg0: i32, %arg1: i32, %arg2: memref<2x16xi32, #tpu.memory_space<smem>>) -> (i32, i32) {
    %c0_i32 = arith.constant 0 : i32
    %c0_i32_0 = arith.constant 0 : i32
    %c0_i32_1 = arith.constant 0 : i32
    return %c0_i32, %c0_i32_0 : i32, i32
  }
  func.func @transform_4(%arg0: i32, %arg1: i32, %arg2: memref<2x16xi32, #tpu.memory_space<smem>>) -> (i32, i32) {
    %c2_i32 = arith.constant 2 : i32
    %0 = arith.muli %arg0, %c2_i32 : i32
    %1 = arith.addi %0, %arg1 : i32
    %c0_i32 = arith.constant 0 : i32
    %c0_i32_0 = arith.constant 0 : i32
    return %1, %c0_i32 : i32, i32
  }
}

</mosaic_0001>

<llo_original>
// kernel: tpu_custom_call.1
$region0: #{tpu_custom_call.1}
  #allocation0 [shape = 'u32[]', space=smem, size = 0x4, offset = 0x4, fixed_abs, tag = 'smem constant byte address 0x4 - core index']
  #allocation1 [shape = 'u32[72,128]{1,0:T(1,128)}', space=vmem, size = 0x9000, scoped, tag = 'internal scratch']
  #allocation2 [shape = 'f32[16,128]{1,0:T(8,128)}', space=vmem, size = 0x2000, scoped, tag = 'scratch operand']
  #allocation3 [shape = 's32[16]{0}', space=sflag, size = 0x40, scoped, tag = 'scratch operand']
  #allocation4 [shape = 's32[1]{0}', space=sflag, size = 0x4, scoped, tag = 'scoped memory for tpu_custom_call.1']
  #allocation5 [shape = 'u8[1024]{0}', space=smem, size = 0x400, scoped, tag = 'prefetched SMEM operand 0']
  #allocation10 [shape = 's32[]', space=sflag, size = 0x4, offset = 0, fixed_abs, tag = 'sflag constant byte address 0x0 - dummy sync flag']
  #allocation11 [shape = 's32[]', space=sflag, size = 0x4, offset = 0, fixed_abs, tag = 'sflag constant byte address 0x0 - dummy sync flag']
  #allocation12 [shape = 'u32[]', space=smem, size = 0x4, offset = 0x44, fixed_abs, tag = 'smem constant byte address 0x44 - assertion arg 0']
  #allocation13 [shape = 'u32[]', space=smem, size = 0x4, offset = 0x48, fixed_abs, tag = 'smem constant byte address 0x48 - assertion arg 1']
  #allocation14 [shape = 's32[]', space=sflag, size = 0x4, offset = 0, fixed_abs, tag = 'sflag constant byte address 0x0 - dummy sync flag']
  #allocation15 [shape = 's32[]', space=sflag, size = 0x4, offset = 0, fixed_abs, tag = 'sflag constant byte address 0x0 - dummy sync flag']
  #allocation16 [shape = 's32[]', space=sflag, size = 0x4, offset = 0, fixed_abs, tag = 'sflag constant byte address 0x0 - dummy sync flag']
  #allocation17 [shape = 's32[]', space=sflag, size = 0x4, offset = 0, fixed_abs, tag = 'sflag constant byte address 0x0 - dummy sync flag']
  #allocation18 [shape = 's32[]', space=sflag, size = 0x4, offset = 0, fixed_abs, tag = 'sflag constant byte address 0x0 - dummy sync flag']
  #allocation19 [shape = 's32[]', space=sflag, size = 0x4, offset = 0, fixed_abs, tag = 'sflag constant byte address 0x0 - dummy sync flag']
  #allocation20 [shape = 's32[]', space=sflag, size = 0x4, offset = 0, fixed_abs, tag = 'sflag constant byte address 0x0 - dummy sync flag']
  #allocation21 [shape = 's32[]', space=sflag, size = 0x4, offset = 0, fixed_abs, tag = 'sflag constant byte address 0x0 - dummy sync flag']
  #allocation22 [shape = 's32[]', space=sflag, size = 0x4, offset = 0, fixed_abs, tag = 'sflag constant byte address 0x0 - dummy sync flag']
  #allocation23 [shape = 's32[]', space=sflag, size = 0x4, offset = 0, fixed_abs, tag = 'sflag constant byte address 0x0 - dummy sync flag']
  #allocation24 [shape = 's32[]', space=sflag, size = 0x4, offset = 0, fixed_abs, tag = 'sflag constant byte address 0x0 - dummy sync flag']
  #allocation25 [shape = 's32[]', space=sflag, size = 0x4, offset = 0, fixed_abs, tag = 'sflag constant byte address 0x0 - dummy sync flag']
  #allocation26 [shape = 's32[]', space=sflag, size = 0x4, offset = 0, fixed_abs, tag = 'sflag constant byte address 0x0 - dummy sync flag']
  #allocation27 [shape = 's32[]', space=sflag, size = 0x4, offset = 0, fixed_abs, tag = 'sflag constant byte address 0x0 - dummy sync flag']
  #allocation28 [shape = 's32[]', space=sflag, size = 0x4, offset = 0, fixed_abs, tag = 'sflag constant byte address 0x0 - dummy sync flag']
  #allocation29 [shape = 's32[]', space=sflag, size = 0x4, offset = 0, fixed_abs, tag = 'sflag constant byte address 0x0 - dummy sync flag']
  #allocation30 [shape = 's32[]', space=sflag, size = 0x4, offset = 0, fixed_abs, tag = 'sflag constant byte address 0x0 - dummy sync flag']
  #allocation31 [shape = 's32[]', space=sflag, size = 0x4, offset = 0, fixed_abs, tag = 'sflag constant byte address 0x0 - dummy sync flag']
  #allocation32 [shape = 's32[]', space=sflag, size = 0x4, offset = 0, fixed_abs, tag = 'sflag constant byte address 0x0 - dummy sync flag']
  #allocation33 [shape = 's32[]', space=sflag, size = 0x4, offset = 0, fixed_abs, tag = 'sflag constant byte address 0x0 - dummy sync flag']
  #allocation34 [shape = 's32[]', space=sflag, size = 0x4, offset = 0, fixed_abs, tag = 'sflag constant byte address 0x0 - dummy sync flag']
  #allocation35 [shape = 's32[]', space=sflag, size = 0x4, offset = 0, fixed_abs, tag = 'sflag constant byte address 0x0 - dummy sync flag']
  #allocation36 [shape = 's32[]', space=sflag, size = 0x4, offset = 0, fixed_abs, tag = 'sflag constant byte address 0x0 - dummy sync flag']
  #allocation37 [shape = 's32[]', space=sflag, size = 0x4, offset = 0, fixed_abs, tag = 'sflag constant byte address 0x0 - dummy sync flag']
  #allocation38 [shape = 's32[]', space=sflag, size = 0x4, offset = 0, fixed_abs, tag = 'sflag constant byte address 0x0 - dummy sync flag']
  #allocation39 [shape = 's32[]', space=sflag, size = 0x4, offset = 0, fixed_abs, tag = 'sflag constant byte address 0x0 - dummy sync flag']
  #allocation40 [shape = 's32[]', space=sflag, size = 0x4, offset = 0, fixed_abs, tag = 'sflag constant byte address 0x0 - dummy sync flag']
  #allocation41 [shape = 's32[]', space=sflag, size = 0x4, offset = 0, fixed_abs, tag = 'sflag constant byte address 0x0 - dummy sync flag']
  #allocation42 [shape = 's32[]', space=sflag, size = 0x4, offset = 0, fixed_abs, tag = 'sflag constant byte address 0x0 - dummy sync flag']
  #allocation43 [shape = 's32[]', space=sflag, size = 0x4, offset = 0, fixed_abs, tag = 'sflag constant byte address 0x0 - dummy sync flag']
  %s0 = inlined_call_operand.hbm [shape: s32[2,16], index: 0, kind: input, shape index: {}]
  %s1 = inlined_call_operand.hbm [shape: f32[128,128], index: 1, kind: input, shape index: {}]
  %s2 = inlined_call_operand.hbm [shape: f32[16,128], index: 2, kind: input, shape index: {}]
  %s3 = inlined_call_operand.vmem [shape: f32[1,128], index: 3, kind: input, shape index: {}]
  %s4 = inlined_call_operand.vmem [shape: f32[1,128], index: 4, kind: input, shape index: {}]
  %s5 = inlined_call_operand.hbm [shape: f32[32,128], index: 5, kind: output, shape index: {}]
  %s6 = sld [smem:[#allocation0]]
  $region121: #{tpu_custom_call.1} parent=0
    _
  %s8 = ssub.s32 1, %s6
  %s9 = scalar_select 0, %s8, %s6
  %s11 = sshll.u32 %s0, 4
  %s12 = int_to_ptr.hbm [resolvable:$true] %s11
  %14 = dma.hbm_to_smem %s12, 32, [#allocation5], [#allocation4]
  %16 = dma.done [#allocation4], 32
  %17 = sfence
  $region1: #{tpu_custom_call.1} parent=0
    #allocation6 [shape = 'u8[8192]{0}', space=vmem, size = 0x2000, scoped, tag = 'input window, operand 2']
    #allocation7 [shape = 's32[2]{0}', space=sflag, size = 0x8, scoped, tag = 'scoped memory for tpu_custom_call.1']
    #allocation8 [shape = 's32[2]{0}', space=sflag, size = 0x8, scoped, tag = 'scoped memory for tpu_custom_call.1']
    #allocation9 [shape = 'u8[8192]{0}', space=vmem, size = 0x2000, scoped, tag = 'output window, operand 0']
    %18 = vsyncpa [#allocation7], 0
    %s19 = scalar_lea.sflag [#allocation7], 1
    %20 = vsyncpa %s19, 0
    %21 = vsyncpa [#allocation8], 0
    %s22 = scalar_lea.sflag [#allocation8], 1
    %23 = vsyncpa %s22, 0
    loop: start=0, step=1, limit=6
    $region2: #{tpu_custom_call.1} parent=1 // loop_pre_header
      _
    $region3: #{tpu_custom_call.1} parent=1 // loop_header
      %s25 = sphi 0, %s29
      %p26 = scmp.ge.s32.totalorder %s25, 6
      %s32 = sphi 0, %s44
      %s33 = sphi 0, %s40
      %s34 = sphi 0, %s32
      %s35 = sphi 0, %s33
      %s36 = sphi 0, %s34
      %s37 = sphi 0, %s35
      %s47 = sphi 0, %s49
      %s50 = sphi 0, %s47
      %s51 = sphi 0, %s50
      %s67 = sphi 0, %s51
      %s71 = sphi 0, %s71
      %s73 = sphi 0, %s71
      %s74 = sphi 0, %s73
      %s88 = sphi 0, %s74
      %s92 = sphi 0, %s92
      %s94 = sphi 0, %s92
      %s95 = sphi 0, %s94
      %s109 = sphi 0, %s95
      %s119 = sphi 0, %s121
      %s122 = sphi 0, %s119
      %s123 = sphi 0, %s122
      %s139 = sphi 0, %s123
    $region4: #{tpu_custom_call.1} parent=1 // loop_header_branch
      %28 = sbr.rel (%p26) target = $region8
    $region5: #{tpu_custom_call.1} parent=1 // loop_body
      %s30 = ssub.s32 %s25, 1
      %s31 = ssub.s32 %s25, 2
      %s38 = sadd.s32 1, %s33
      %p39 = scmp.ge.s32.totalorder %s38, 2
      %s40 = scalar_select %p39, 0, %s38
      %s41 = sadd.s32 1, %s32
      %s42 = scalar_select %p39, %s41, %s32
      %p43 = scmp.ge.s32.totalorder %s42, 2
      %s44 = scalar_select %p43, 0, %s42
      %s45 = ssub.s32 %s33, %s40
      %p46 = scmp.eq.s32.totalorder %s45, 0
      %s48 = sadd.s32 %s47, 1
      %s49 = scalar_select %p46, %s47, %s48
      %p52 = pneg %p46
      %p53 = scmp.eq.s32.totalorder %s25, 3
      %p54 = por %p52, %p53
      %p55 = scmp.ne.s32.totalorder %s47, %s50
      %p56 = scmp.eq.s32.totalorder %s25, 0
      %p57 = por %p55, %p56
      %p58 = scmp.ne.s32.totalorder %s47, %s50
      %p59 = scmp.eq.s32.totalorder %s30, 3
      %p60 = por %p58, %p59
      %p61 = scmp.ne.s32.totalorder %s50, %s51
      %p62 = scmp.eq.s32.totalorder %s30, 0
      %p63 = por %p61, %p62
      %p64 = scmp.ne.s32.totalorder %s50, %s51
      %p65 = scmp.eq.s32.totalorder %s31, 3
      %p66 = por %p64, %p65
      %p68 = scmp.ne.s32.totalorder %s51, %s67
      %p69 = scmp.eq.s32.totalorder %s31, 0
      %p70 = por %p68, %p69
      %s72 = sadd.s32 %s71, 1
      %p75 = scmp.eq.s32.totalorder %s25, 3
      %p76 = scmp.ne.s32.totalorder %s71, %s73
      %p77 = scmp.eq.s32.totalorder %s25, 0
      %p78 = por %p76, %p77
      %p79 = scmp.ne.s32.totalorder %s71, %s73
      %p80 = scmp.eq.s32.totalorder %s30, 3
      %p81 = por %p79, %p80
      %p82 = scmp.ne.s32.totalorder %s73, %s74
      %p83 = scmp.eq.s32.totalorder %s30, 0
      %p84 = por %p82, %p83
      %p85 = scmp.ne.s32.totalorder %s73, %s74
      %p86 = scmp.eq.s32.totalorder %s31, 3
      %p87 = por %p85, %p86
      %p89 = scmp.ne.s32.totalorder %s74, %s88
      %p90 = scmp.eq.s32.totalorder %s31, 0
      %p91 = por %p89, %p90
      %s93 = sadd.s32 %s92, 1
      %p96 = scmp.eq.s32.totalorder %s25, 3
      %p97 = scmp.ne.s32.totalorder %s92, %s94
      %p98 = scmp.eq.s32.totalorder %s25, 0
      %p99 = por %p97, %p98
      %p100 = scmp.ne.s32.totalorder %s92, %s94
      %p101 = scmp.eq.s32.totalorder %s30, 3
      %p102 = por %p100, %p101
      %p103 = scmp.ne.s32.totalorder %s94, %s95
      %p104 = scmp.eq.s32.totalorder %s30, 0
      %p105 = por %p103, %p104
      %p106 = scmp.ne.s32.totalorder %s94, %s95
      %p107 = scmp.eq.s32.totalorder %s31, 3
      %p108 = por %p106, %p107
      %p110 = scmp.ne.s32.totalorder %s95, %s109
      %p111 = scmp.eq.s32.totalorder %s31, 0
      %p112 = por %p110, %p111
      %s113 = smul.u32 %s32, 2
      %s114 = sadd.s32 %s113, %s33
      %s115 = smul.u32 %s44, 2
      %s116 = sadd.s32 %s115, %s40
      %s117 = ssub.s32 %s114, %s116
      %p118 = scmp.eq.s32.totalorder %s117, 0
      %s120 = sadd.s32 %s119, 1
      %s121 = scalar_select %p118, %s119, %s120
      %p124 = pneg %p118
      %p125 = scmp.eq.s32.totalorder %s25, 3
      %p126 = por %p124, %p125
      %p127 = scmp.ne.s32.totalorder %s119, %s122
      %p128 = scmp.eq.s32.totalorder %s25, 0
      %p129 = por %p127, %p128
      %p130 = scmp.ne.s32.totalorder %s119, %s122
      %p131 = scmp.eq.s32.totalorder %s30, 3
      %p132 = por %p130, %p131
      %p133 = scmp.ne.s32.totalorder %s122, %s123
      %p134 = scmp.eq.s32.totalorder %s30, 0
      %p135 = por %p133, %p134
      %p136 = scmp.ne.s32.totalorder %s122, %s123
      %p137 = scmp.eq.s32.totalorder %s31, 3
      %p138 = por %p136, %p137
      %p140 = scmp.ne.s32.totalorder %s123, %s139
      %p141 = scmp.eq.s32.totalorder %s31, 0
      %p142 = por %p140, %p141
      %p143 = scmp.le.s32.totalorder 1, %s25
      %p144 = scmp.lt.s32.totalorder %s25, 5
      %p145 = pnand %p143, %p144
      %p146 = pneg %p145
      // Predicated region
      $region9: #{tpu_custom_call.1} parent=5 // pred_check
        _
      $region10: #{tpu_custom_call.1} parent=5 // pred_check_branch
        %148 = sbr.rel (%p145) target = $region12
      $region11: #{tpu_custom_call.1} parent=5 // pred_region
        %s149 = ssub.s32 %s25, 1
        // Predicated region
        $region13: #{tpu_custom_call.1} parent=11 // pred_check
          %p150 = pneg %p84
        $region14: #{tpu_custom_call.1} parent=11 // pred_check_branch
          %152 = sbr.rel (%p150) target = $region16
        $region15: #{tpu_custom_call.1} parent=11 // pred_region
          _
        $region16: #{tpu_custom_call.1} parent=11 // pred_fallthru
          _
        // Predicated region
        $region17: #{tpu_custom_call.1} parent=11 // pred_check
          %p153 = pneg %p105
        $region18: #{tpu_custom_call.1} parent=11 // pred_check_branch
          %155 = sbr.rel (%p153) target = $region20
        $region19: #{tpu_custom_call.1} parent=11 // pred_region
          _
        $region20: #{tpu_custom_call.1} parent=11 // pred_fallthru
          _
      $region12: #{tpu_custom_call.1} parent=5 // pred_fallthru
        _
      %p156 = scmp.lt.s32.totalorder %s25, 4
      // Predicated region
      $region21: #{tpu_custom_call.1} parent=5 // pred_check
        %p157 = pneg %p156
      $region22: #{tpu_custom_call.1} parent=5 // pred_check_branch
        %159 = sbr.rel (%p157) target = $region24
      $region23: #{tpu_custom_call.1} parent=5 // pred_region
        // Predicated region
        $region25: #{tpu_custom_call.1} parent=23 // pred_check
          %p160 = pneg %p57
        $region26: #{tpu_custom_call.1} parent=23 // pred_check_branch
          %162 = sbr.rel (%p160) target = $region28
        $region27: #{tpu_custom_call.1} parent=23 // pred_region
          %s163 = sand.u32 %s47, 1
          %s164 = scalar_lea.sflag [#allocation7], %s163
          %s165 = sand.u32 %s47, 1
          %s166 = smul.addr %s165, 8
          %s167 = scalar_lea.vmem [#allocation6], %s166
          %169 = vsyncadd %s164, 0
          %s170 = smul.addr %s33, 8
          %s171 = scalar_lea.hbm %s2, %s170
          %s173 = sshll.u32 %s171, 4
          %s174 = int_to_ptr.hbm [resolvable:$true] %s173
          %s175 = sshll.u32 %s167, 4
          %s176 = int_to_ptr.vmem [resolvable:$true] %s175
          %178 = dma.hbm_to_vmem [thread:$0]  %s174, 128, %s176, %s164
        $region28: #{tpu_custom_call.1} parent=23 // pred_fallthru
          _
      $region24: #{tpu_custom_call.1} parent=5 // pred_fallthru
        _
      %p179 = scmp.le.s32.totalorder 1, %s25
      %p180 = scmp.lt.s32.totalorder %s25, 5
      %p181 = pnand %p179, %p180
      %p182 = pneg %p181
      // Predicated region
      $region29: #{tpu_custom_call.1} parent=5 // pred_check
        _
      $region30: #{tpu_custom_call.1} parent=5 // pred_check_branch
        %184 = sbr.rel (%p181) target = $region32
      $region31: #{tpu_custom_call.1} parent=5 // pred_region
        %s185 = ssub.s32 %s25, 1
        %s186 = sand.u32 %s50, 1
        %s187 = scalar_lea.sflag [#allocation7], %s186
        %s188 = sand.u32 %s50, 1
        %s189 = smul.addr %s188, 8
        %s190 = scalar_lea.vmem [#allocation6], %s189
        // Predicated region
        $region33: #{tpu_custom_call.1} parent=31 // pred_check
          %p191 = pneg %p63
        $region34: #{tpu_custom_call.1} parent=31 // pred_check_branch
          %193 = sbr.rel (%p191) target = $region36
        $region35: #{tpu_custom_call.1} parent=31 // pred_region
          %195 = dma.done %s187, 128
        $region36: #{tpu_custom_call.1} parent=31 // pred_fallthru
          _
        %s196 = sand.u32 %s50, 1
        %s197 = scalar_lea.sflag [#allocation7], %s196
        %s198 = sand.u32 %s50, 1
        %s199 = smul.addr %s198, 8
        %s200 = scalar_lea.vmem [#allocation6], %s199
        %p201 = pneg %p63
        %p202 = pneg %p60
        %p203 = pneg %p84
        %p204 = pneg %p81
        %p205 = pneg %p105
        %p206 = pneg %p102
        %p207 = pneg %p135
        %p208 = pneg %p132
        %s209 = sand.u32 %s122, 1
        %s210 = scalar_lea.sflag [#allocation8], %s209
        %s211 = sand.u32 %s122, 1
        %s212 = smul.addr %s211, 8
        %s213 = scalar_lea.vmem [#allocation9], %s212
        %s214 = smul.u32 %s34, 2
        %s215 = sadd.s32 %s214, %s35
        %p216 = scmp.lt.s32.totalorder %s35, 0
        %s217 = ssub.s32 0, %s35
        %s218 = scalar_select %p216, %s217, %s35
        %s219 = sand.u32 %s218, 1
        %s220 = ssub.s32 0, %s219
        %s221 = scalar_select %p216, %s220, %s219
        %p222 = scmp.ne.s32.totalorder %s221, 0
        %p223 = scmp.lt.s32.totalorder %s221, 0
        %p224 = pnand %p223, %p222
        %p225 = pneg %p224
        %s226 = sadd.s32 %s221, 2
        %s227 = scalar_select %p225, %s226, %s221
        %s228 = ssub.s32 1, %s227
        %p229 = scmp.eq.s32.totalorder %s35, 0
        // Predicated region
        $region37: #{tpu_custom_call.1} parent=31 // pred_check
          %p230 = pneg %p229
        $region38: #{tpu_custom_call.1} parent=31 // pred_check_branch
          %232 = sbr.rel (%p230) target = $region40
        $region39: #{tpu_custom_call.1} parent=31 // pred_region
          %s233 = smul.u32 %s227, 8
          %s234 = smul.u32 %s35, 8
          %s235 = sshra.s32 %s234, 7
          %s236 = sand.u32 %s234, 127
          %s237 = sadd.s32 %s235, %s34
          %s238 = smul.u32 %s237, 128
          %s239 = sshra.s32 %s234, 7
          %s240 = sand.u32 %s234, 127
          %s241 = sadd.s32 %s238, %s240
          %s242 = sld [smem:[#allocation5 + %s241]]
          %s243 = scalar_lea.hbm %s1, %s242
          %s244 = scalar_lea.vmem [#allocation2], %s233
          %s245 = scalar_lea.sflag [#allocation3], %s233
          // Predicated region
          $region41: #{tpu_custom_call.1} parent=39 // pred_check
            _
          $region42: #{tpu_custom_call.1} parent=39 // pred_check_branch
            %247 = sbr.rel target = $region44
          $region43: #{tpu_custom_call.1} parent=39 // pred_region
            %248 = sst [smem:[#allocation12]] [#allocation11]
            %249 = sst [smem:[#allocation13]] [#allocation10]
          $region44: #{tpu_custom_call.1} parent=39 // pred_fallthru
            _
          %251 = shalt.err (0)
          %s253 = sshll.u32 %s243, 4
          %s254 = int_to_ptr.hbm [resolvable:$true] %s253
          %s255 = sshll.u32 %s244, 4
          %s256 = int_to_ptr.vmem [resolvable:$true] %s255
          %258 = dma.hbm_to_vmem [thread:$0]  %s254, 16, %s256, %s245
          %s259 = sadd.s32 %s234, 1
          %s260 = sshra.s32 %s259, 7
          %s261 = sand.u32 %s259, 127
          %s262 = sadd.s32 %s260, %s34
          %s263 = smul.u32 %s262, 128
          %s264 = sshra.s32 %s259, 7
          %s265 = sand.u32 %s259, 127
          %s266 = sadd.s32 %s263, %s265
          %s267 = sld [smem:[#allocation5 + %s266]]
          %s268 = sadd.s32 %s233, 1
          %s269 = scalar_lea.hbm %s1, %s267
          %s270 = scalar_lea.vmem [#allocation2], %s268
          %s271 = scalar_lea.sflag [#allocation3], %s268
          // Predicated region
          $region45: #{tpu_custom_call.1} parent=39 // pred_check
            _
          $region46: #{tpu_custom_call.1} parent=39 // pred_check_branch
            %273 = sbr.rel target = $region48
          $region47: #{tpu_custom_call.1} parent=39 // pred_region
            %274 = sst [smem:[#allocation12]] [#allocation15]
            %275 = sst [smem:[#allocation13]] [#allocation14]
          $region48: #{tpu_custom_call.1} parent=39 // pred_fallthru
            _
          %277 = shalt.err (0)
          %s279 = sshll.u32 %s269, 4
          %s280 = int_to_ptr.hbm [resolvable:$true] %s279
          %s281 = sshll.u32 %s270, 4
          %s282 = int_to_ptr.vmem [resolvable:$true] %s281
          %284 = dma.hbm_to_vmem [thread:$0]  %s280, 16, %s282, %s271
          %s285 = sadd.s32 %s234, 2
          %s286 = sshra.s32 %s285, 7
          %s287 = sand.u32 %s285, 127
          %s288 = sadd.s32 %s286, %s34
          %s289 = smul.u32 %s288, 128
          %s290 = sshra.s32 %s285, 7
          %s291 = sand.u32 %s285, 127
          %s292 = sadd.s32 %s289, %s291
          %s293 = sld [smem:[#allocation5 + %s292]]
          %s294 = sadd.s32 %s233, 2
          %s295 = scalar_lea.hbm %s1, %s293
          %s296 = scalar_lea.vmem [#allocation2], %s294
          %s297 = scalar_lea.sflag [#allocation3], %s294
          // Predicated region
          $region49: #{tpu_custom_call.1} parent=39 // pred_check
            _
          $region50: #{tpu_custom_call.1} parent=39 // pred_check_branch
            %299 = sbr.rel target = $region52
          $region51: #{tpu_custom_call.1} parent=39 // pred_region
            %300 = sst [smem:[#allocation12]] [#allocation17]
            %301 = sst [smem:[#allocation13]] [#allocation16]
          $region52: #{tpu_custom_call.1} parent=39 // pred_fallthru
            _
          %303 = shalt.err (0)
          %s305 = sshll.u32 %s295, 4
          %s306 = int_to_ptr.hbm [resolvable:$true] %s305
          %s307 = sshll.u32 %s296, 4
          %s308 = int_to_ptr.vmem [resolvable:$true] %s307
          %310 = dma.hbm_to_vmem [thread:$0]  %s306, 16, %s308, %s297
          %s311 = sadd.s32 %s234, 3
          %s312 = sshra.s32 %s311, 7
          %s313 = sand.u32 %s311, 127
          %s314 = sadd.s32 %s312, %s34
          %s315 = smul.u32 %s314, 128
          %s316 = sshra.s32 %s311, 7
          %s317 = sand.u32 %s311, 127
          %s318 = sadd.s32 %s315, %s317
          %s319 = sld [smem:[#allocation5 + %s318]]
          %s320 = sadd.s32 %s233, 3
          %s321 = scalar_lea.hbm %s1, %s319
          %s322 = scalar_lea.vmem [#allocation2], %s320
          %s323 = scalar_lea.sflag [#allocation3], %s320
          // Predicated region
          $region53: #{tpu_custom_call.1} parent=39 // pred_check
            _
          $region54: #{tpu_custom_call.1} parent=39 // pred_check_branch
            %325 = sbr.rel target = $region56
          $region55: #{tpu_custom_call.1} parent=39 // pred_region
            %326 = sst [smem:[#allocation12]] [#allocation19]
            %327 = sst [smem:[#allocation13]] [#allocation18]
          $region56: #{tpu_custom_call.1} parent=39 // pred_fallthru
            _
          %329 = shalt.err (0)
          %s331 = sshll.u32 %s321, 4
          %s332 = int_to_ptr.hbm [resolvable:$true] %s331
          %s333 = sshll.u32 %s322, 4
          %s334 = int_to_ptr.vmem [resolvable:$true] %s333
          %336 = dma.hbm_to_vmem [thread:$0]  %s332, 16, %s334, %s323
          %s337 = sadd.s32 %s234, 4
          %s338 = sshra.s32 %s337, 7
          %s339 = sand.u32 %s337, 127
          %s340 = sadd.s32 %s338, %s34
          %s341 = smul.u32 %s340, 128
          %s342 = sshra.s32 %s337, 7
          %s343 = sand.u32 %s337, 127
          %s344 = sadd.s32 %s341, %s343
          %s345 = sld [smem:[#allocation5 + %s344]]
          %s346 = sadd.s32 %s233, 4
          %s347 = scalar_lea.hbm %s1, %s345
          %s348 = scalar_lea.vmem [#allocation2], %s346
          %s349 = scalar_lea.sflag [#allocation3], %s346
          // Predicated region
          $region57: #{tpu_custom_call.1} parent=39 // pred_check
            _
          $region58: #{tpu_custom_call.1} parent=39 // pred_check_branch
            %351 = sbr.rel target = $region60
          $region59: #{tpu_custom_call.1} parent=39 // pred_region
            %352 = sst [smem:[#allocation12]] [#allocation21]
            %353 = sst [smem:[#allocation13]] [#allocation20]
          $region60: #{tpu_custom_call.1} parent=39 // pred_fallthru
            _
          %355 = shalt.err (0)
          %s357 = sshll.u32 %s347, 4
          %s358 = int_to_ptr.hbm [resolvable:$true] %s357
          %s359 = sshll.u32 %s348, 4
          %s360 = int_to_ptr.vmem [resolvable:$true] %s359
          %362 = dma.hbm_to_vmem [thread:$0]  %s358, 16, %s360, %s349
          %s363 = sadd.s32 %s234, 5
          %s364 = sshra.s32 %s363, 7
          %s365 = sand.u32 %s363, 127
          %s366 = sadd.s32 %s364, %s34
          %s367 = smul.u32 %s366, 128
          %s368 = sshra.s32 %s363, 7
          %s369 = sand.u32 %s363, 127
          %s370 = sadd.s32 %s367, %s369
          %s371 = sld [smem:[#allocation5 + %s370]]
          %s372 = sadd.s32 %s233, 5
          %s373 = scalar_lea.hbm %s1, %s371
          %s374 = scalar_lea.vmem [#allocation2], %s372
          %s375 = scalar_lea.sflag [#allocation3], %s372
          // Predicated region
          $region61: #{tpu_custom_call.1} parent=39 // pred_check
            _
          $region62: #{tpu_custom_call.1} parent=39 // pred_check_branch
            %377 = sbr.rel target = $region64
          $region63: #{tpu_custom_call.1} parent=39 // pred_region
            %378 = sst [smem:[#allocation12]] [#allocation23]
            %379 = sst [smem:[#allocation13]] [#allocation22]
          $region64: #{tpu_custom_call.1} parent=39 // pred_fallthru
            _
          %381 = shalt.err (0)
          %s383 = sshll.u32 %s373, 4
          %s384 = int_to_ptr.hbm [resolvable:$true] %s383
          %s385 = sshll.u32 %s374, 4
          %s386 = int_to_ptr.vmem [resolvable:$true] %s385
          %388 = dma.hbm_to_vmem [thread:$0]  %s384, 16, %s386, %s375
          %s389 = sadd.s32 %s234, 6
          %s390 = sshra.s32 %s389, 7
          %s391 = sand.u32 %s389, 127
          %s392 = sadd.s32 %s390, %s34
          %s393 = smul.u32 %s392, 128
          %s394 = sshra.s32 %s389, 7
          %s395 = sand.u32 %s389, 127
          %s396 = sadd.s32 %s393, %s395
          %s397 = sld [smem:[#allocation5 + %s396]]
          %s398 = sadd.s32 %s233, 6
          %s399 = scalar_lea.hbm %s1, %s397
          %s400 = scalar_lea.vmem [#allocation2], %s398
          %s401 = scalar_lea.sflag [#allocation3], %s398
          // Predicated region
          $region65: #{tpu_custom_call.1} parent=39 // pred_check
            _
          $region66: #{tpu_custom_call.1} parent=39 // pred_check_branch
            %403 = sbr.rel target = $region68
          $region67: #{tpu_custom_call.1} parent=39 // pred_region
            %404 = sst [smem:[#allocation12]] [#allocation25]
            %405 = sst [smem:[#allocation13]] [#allocation24]
          $region68: #{tpu_custom_call.1} parent=39 // pred_fallthru
            _
          %407 = shalt.err (0)
          %s409 = sshll.u32 %s399, 4
          %s410 = int_to_ptr.hbm [resolvable:$true] %s409
          %s411 = sshll.u32 %s400, 4
          %s412 = int_to_ptr.vmem [resolvable:$true] %s411
          %414 = dma.hbm_to_vmem [thread:$0]  %s410, 16, %s412, %s401
          %s415 = sadd.s32 %s234, 7
          %s416 = sshra.s32 %s415, 7
          %s417 = sand.u32 %s415, 127
          %s418 = sadd.s32 %s416, %s34
          %s419 = smul.u32 %s418, 128
          %s420 = sshra.s32 %s415, 7
          %s421 = sand.u32 %s415, 127
          %s422 = sadd.s32 %s419, %s421
          %s423 = sld [smem:[#allocation5 + %s422]]
          %s424 = sadd.s32 %s233, 7
          %s425 = scalar_lea.hbm %s1, %s423
          %s426 = scalar_lea.vmem [#allocation2], %s424
          %s427 = scalar_lea.sflag [#allocation3], %s424
          // Predicated region
          $region69: #{tpu_custom_call.1} parent=39 // pred_check
            _
          $region70: #{tpu_custom_call.1} parent=39 // pred_check_branch
            %429 = sbr.rel target = $region72
          $region71: #{tpu_custom_call.1} parent=39 // pred_region
            %430 = sst [smem:[#allocation12]] [#allocation27]
            %431 = sst [smem:[#allocation13]] [#allocation26]
          $region72: #{tpu_custom_call.1} parent=39 // pred_fallthru
            _
          %433 = shalt.err (0)
          %s435 = sshll.u32 %s425, 4
          %s436 = int_to_ptr.hbm [resolvable:$true] %s435
          %s437 = sshll.u32 %s426, 4
          %s438 = int_to_ptr.vmem [resolvable:$true] %s437
          %440 = dma.hbm_to_vmem [thread:$0]  %s436, 16, %s438, %s427
        $region40: #{tpu_custom_call.1} parent=31 // pred_fallthru
          _
        %s441 = sadd.s32 %s35, 1
        %p442 = scmp.lt.s32.totalorder %s441, 2
        // Predicated region
        $region73: #{tpu_custom_call.1} parent=31 // pred_check
          %p443 = pneg %p442
        $region74: #{tpu_custom_call.1} parent=31 // pred_check_branch
          %445 = sbr.rel (%p443) target = $region76
        $region75: #{tpu_custom_call.1} parent=31 // pred_region
          %s446 = smul.u32 %s228, 8
          %s447 = smul.u32 %s441, 8
          %s448 = sshra.s32 %s447, 7
          %s449 = sand.u32 %s447, 127
          %s450 = sadd.s32 %s448, %s34
          %s451 = smul.u32 %s450, 128
          %s452 = sshra.s32 %s447, 7
          %s453 = sand.u32 %s447, 127
          %s454 = sadd.s32 %s451, %s453
          %s455 = sld [smem:[#allocation5 + %s454]]
          %s456 = scalar_lea.hbm %s1, %s455
          %s457 = scalar_lea.vmem [#allocation2], %s446
          %s458 = scalar_lea.sflag [#allocation3], %s446
          // Predicated region
          $region77: #{tpu_custom_call.1} parent=75 // pred_check
            _
          $region78: #{tpu_custom_call.1} parent=75 // pred_check_branch
            %460 = sbr.rel target = $region80
          $region79: #{tpu_custom_call.1} parent=75 // pred_region
            %461 = sst [smem:[#allocation12]] [#allocation29]
            %462 = sst [smem:[#allocation13]] [#allocation28]
          $region80: #{tpu_custom_call.1} parent=75 // pred_fallthru
            _
          %464 = shalt.err (0)
          %s466 = sshll.u32 %s456, 4
          %s467 = int_to_ptr.hbm [resolvable:$true] %s466
          %s468 = sshll.u32 %s457, 4
          %s469 = int_to_ptr.vmem [resolvable:$true] %s468
          %471 = dma.hbm_to_vmem [thread:$0]  %s467, 16, %s469, %s458
          %s472 = sadd.s32 %s447, 1
          %s473 = sshra.s32 %s472, 7
          %s474 = sand.u32 %s472, 127
          %s475 = sadd.s32 %s473, %s34
          %s476 = smul.u32 %s475, 128
          %s477 = sshra.s32 %s472, 7
          %s478 = sand.u32 %s472, 127
          %s479 = sadd.s32 %s476, %s478
          %s480 = sld [smem:[#allocation5 + %s479]]
          %s481 = sadd.s32 %s446, 1
          %s482 = scalar_lea.hbm %s1, %s480
          %s483 = scalar_lea.vmem [#allocation2], %s481
          %s484 = scalar_lea.sflag [#allocation3], %s481
          // Predicated region
          $region81: #{tpu_custom_call.1} parent=75 // pred_check
            _
          $region82: #{tpu_custom_call.1} parent=75 // pred_check_branch
            %486 = sbr.rel target = $region84
          $region83: #{tpu_custom_call.1} parent=75 // pred_region
            %487 = sst [smem:[#allocation12]] [#allocation31]
            %488 = sst [smem:[#allocation13]] [#allocation30]
          $region84: #{tpu_custom_call.1} parent=75 // pred_fallthru
            _
          %490 = shalt.err (0)
          %s492 = sshll.u32 %s482, 4
          %s493 = int_to_ptr.hbm [resolvable:$true] %s492
          %s494 = sshll.u32 %s483, 4
          %s495 = int_to_ptr.vmem [resolvable:$true] %s494
          %497 = dma.hbm_to_vmem [thread:$0]  %s493, 16, %s495, %s484
          %s498 = sadd.s32 %s447, 2
          %s499 = sshra.s32 %s498, 7
          %s500 = sand.u32 %s498, 127
          %s501 = sadd.s32 %s499, %s34
          %s502 = smul.u32 %s501, 128
          %s503 = sshra.s32 %s498, 7
          %s504 = sand.u32 %s498, 127
          %s505 = sadd.s32 %s502, %s504
          %s506 = sld [smem:[#allocation5 + %s505]]
          %s507 = sadd.s32 %s446, 2
          %s508 = scalar_lea.hbm %s1, %s506
          %s509 = scalar_lea.vmem [#allocation2], %s507
          %s510 = scalar_lea.sflag [#allocation3], %s507
          // Predicated region
          $region85: #{tpu_custom_call.1} parent=75 // pred_check
            _
          $region86: #{tpu_custom_call.1} parent=75 // pred_check_branch
            %512 = sbr.rel target = $region88
          $region87: #{tpu_custom_call.1} parent=75 // pred_region
            %513 = sst [smem:[#allocation12]] [#allocation33]
            %514 = sst [smem:[#allocation13]] [#allocation32]
          $region88: #{tpu_custom_call.1} parent=75 // pred_fallthru
            _
          %516 = shalt.err (0)
          %s518 = sshll.u32 %s508, 4
          %s519 = int_to_ptr.hbm [resolvable:$true] %s518
          %s520 = sshll.u32 %s509, 4
          %s521 = int_to_ptr.vmem [resolvable:$true] %s520
          %523 = dma.hbm_to_vmem [thread:$0]  %s519, 16, %s521, %s510
          %s524 = sadd.s32 %s447, 3
          %s525 = sshra.s32 %s524, 7
          %s526 = sand.u32 %s524, 127
          %s527 = sadd.s32 %s525, %s34
          %s528 = smul.u32 %s527, 128
          %s529 = sshra.s32 %s524, 7
          %s530 = sand.u32 %s524, 127
          %s531 = sadd.s32 %s528, %s530
          %s532 = sld [smem:[#allocation5 + %s531]]
          %s533 = sadd.s32 %s446, 3
          %s534 = scalar_lea.hbm %s1, %s532
          %s535 = scalar_lea.vmem [#allocation2], %s533
          %s536 = scalar_lea.sflag [#allocation3], %s533
          // Predicated region
          $region89: #{tpu_custom_call.1} parent=75 // pred_check
            _
          $region90: #{tpu_custom_call.1} parent=75 // pred_check_branch
            %538 = sbr.rel target = $region92
          $region91: #{tpu_custom_call.1} parent=75 // pred_region
            %539 = sst [smem:[#allocation12]] [#allocation35]
            %540 = sst [smem:[#allocation13]] [#allocation34]
          $region92: #{tpu_custom_call.1} parent=75 // pred_fallthru
            _
          %542 = shalt.err (0)
          %s544 = sshll.u32 %s534, 4
          %s545 = int_to_ptr.hbm [resolvable:$true] %s544
          %s546 = sshll.u32 %s535, 4
          %s547 = int_to_ptr.vmem [resolvable:$true] %s546
          %549 = dma.hbm_to_vmem [thread:$0]  %s545, 16, %s547, %s536
          %s550 = sadd.s32 %s447, 4
          %s551 = sshra.s32 %s550, 7
          %s552 = sand.u32 %s550, 127
          %s553 = sadd.s32 %s551, %s34
          %s554 = smul.u32 %s553, 128
          %s555 = sshra.s32 %s550, 7
          %s556 = sand.u32 %s550, 127
          %s557 = sadd.s32 %s554, %s556
          %s558 = sld [smem:[#allocation5 + %s557]]
          %s559 = sadd.s32 %s446, 4
          %s560 = scalar_lea.hbm %s1, %s558
          %s561 = scalar_lea.vmem [#allocation2], %s559
          %s562 = scalar_lea.sflag [#allocation3], %s559
          // Predicated region
          $region93: #{tpu_custom_call.1} parent=75 // pred_check
            _
          $region94: #{tpu_custom_call.1} parent=75 // pred_check_branch
            %564 = sbr.rel target = $region96
          $region95: #{tpu_custom_call.1} parent=75 // pred_region
            %565 = sst [smem:[#allocation12]] [#allocation37]
            %566 = sst [smem:[#allocation13]] [#allocation36]
          $region96: #{tpu_custom_call.1} parent=75 // pred_fallthru
            _
          %568 = shalt.err (0)
          %s570 = sshll.u32 %s560, 4
          %s571 = int_to_ptr.hbm [resolvable:$true] %s570
          %s572 = sshll.u32 %s561, 4
          %s573 = int_to_ptr.vmem [resolvable:$true] %s572
          %575 = dma.hbm_to_vmem [thread:$0]  %s571, 16, %s573, %s562
          %s576 = sadd.s32 %s447, 5
          %s577 = sshra.s32 %s576, 7
          %s578 = sand.u32 %s576, 127
          %s579 = sadd.s32 %s577, %s34
          %s580 = smul.u32 %s579, 128
          %s581 = sshra.s32 %s576, 7
          %s582 = sand.u32 %s576, 127
          %s583 = sadd.s32 %s580, %s582
          %s584 = sld [smem:[#allocation5 + %s583]]
          %s585 = sadd.s32 %s446, 5
          %s586 = scalar_lea.hbm %s1, %s584
          %s587 = scalar_lea.vmem [#allocation2], %s585
          %s588 = scalar_lea.sflag [#allocation3], %s585
          // Predicated region
          $region97: #{tpu_custom_call.1} parent=75 // pred_check
            _
          $region98: #{tpu_custom_call.1} parent=75 // pred_check_branch
            %590 = sbr.rel target = $region100
          $region99: #{tpu_custom_call.1} parent=75 // pred_region
            %591 = sst [smem:[#allocation12]] [#allocation39]
            %592 = sst [smem:[#allocation13]] [#allocation38]
          $region100: #{tpu_custom_call.1} parent=75 // pred_fallthru
            _
          %594 = shalt.err (0)
          %s596 = sshll.u32 %s586, 4
          %s597 = int_to_ptr.hbm [resolvable:$true] %s596
          %s598 = sshll.u32 %s587, 4
          %s599 = int_to_ptr.vmem [resolvable:$true] %s598
          %601 = dma.hbm_to_vmem [thread:$0]  %s597, 16, %s599, %s588
          %s602 = sadd.s32 %s447, 6
          %s603 = sshra.s32 %s602, 7
          %s604 = sand.u32 %s602, 127
          %s605 = sadd.s32 %s603, %s34
          %s606 = smul.u32 %s605, 128
          %s607 = sshra.s32 %s602, 7
          %s608 = sand.u32 %s602, 127
          %s609 = sadd.s32 %s606, %s608
          %s610 = sld [smem:[#allocation5 + %s609]]
          %s611 = sadd.s32 %s446, 6
          %s612 = scalar_lea.hbm %s1, %s610
          %s613 = scalar_lea.vmem [#allocation2], %s611
          %s614 = scalar_lea.sflag [#allocation3], %s611
          // Predicated region
          $region101: #{tpu_custom_call.1} parent=75 // pred_check
            _
          $region102: #{tpu_custom_call.1} parent=75 // pred_check_branch
            %616 = sbr.rel target = $region104
          $region103: #{tpu_custom_call.1} parent=75 // pred_region
            %617 = sst [smem:[#allocation12]] [#allocation41]
            %618 = sst [smem:[#allocation13]] [#allocation40]
          $region104: #{tpu_custom_call.1} parent=75 // pred_fallthru
            _
          %620 = shalt.err (0)
          %s622 = sshll.u32 %s612, 4
          %s623 = int_to_ptr.hbm [resolvable:$true] %s622
          %s624 = sshll.u32 %s613, 4
          %s625 = int_to_ptr.vmem [resolvable:$true] %s624
          %627 = dma.hbm_to_vmem [thread:$0]  %s623, 16, %s625, %s614
          %s628 = sadd.s32 %s447, 7
          %s629 = sshra.s32 %s628, 7
          %s630 = sand.u32 %s628, 127
          %s631 = sadd.s32 %s629, %s34
          %s632 = smul.u32 %s631, 128
          %s633 = sshra.s32 %s628, 7
          %s634 = sand.u32 %s628, 127
          %s635 = sadd.s32 %s632, %s634
          %s636 = sld [smem:[#allocation5 + %s635]]
          %s637 = sadd.s32 %s446, 7
          %s638 = scalar_lea.hbm %s1, %s636
          %s639 = scalar_lea.vmem [#allocation2], %s637
          %s640 = scalar_lea.sflag [#allocation3], %s637
          // Predicated region
          $region105: #{tpu_custom_call.1} parent=75 // pred_check
            _
          $region106: #{tpu_custom_call.1} parent=75 // pred_check_branch
            %642 = sbr.rel target = $region108
          $region107: #{tpu_custom_call.1} parent=75 // pred_region
            %643 = sst [smem:[#allocation12]] [#allocation43]
            %644 = sst [smem:[#allocation13]] [#allocation42]
          $region108: #{tpu_custom_call.1} parent=75 // pred_fallthru
            _
          %646 = shalt.err (0)
          %s648 = sshll.u32 %s638, 4
          %s649 = int_to_ptr.hbm [resolvable:$true] %s648
          %s650 = sshll.u32 %s639, 4
          %s651 = int_to_ptr.vmem [resolvable:$true] %s650
          %653 = dma.hbm_to_vmem [thread:$0]  %s649, 16, %s651, %s640
        $region76: #{tpu_custom_call.1} parent=31 // pred_fallthru
          _
        %s654 = smul.u32 %s227, 8
        %s655 = scalar_lea.sflag [#allocation3], %s654
        %s656 = smul.u32 1, 1
        %s657 = sshll.u32 %s656, 4
        %658 = dma.done %s655, %s657
        %s659 = sadd.s32 %s654, 1
        %s660 = scalar_lea.sflag [#allocation3], %s659
        %s661 = sshll.u32 %s656, 4
        %662 = dma.done %s660, %s661
        %s663 = sadd.s32 %s654, 2
        %s664 = scalar_lea.sflag [#allocation3], %s663
        %s665 = sshll.u32 %s656, 4
        %666 = dma.done %s664, %s665
        %s667 = sadd.s32 %s654, 3
        %s668 = scalar_lea.sflag [#allocation3], %s667
        %s669 = sshll.u32 %s656, 4
        %670 = dma.done %s668, %s669
        %s671 = sadd.s32 %s654, 4
        %s672 = scalar_lea.sflag [#allocation3], %s671
        %s673 = sshll.u32 %s656, 4
        %674 = dma.done %s672, %s673
        %s675 = sadd.s32 %s654, 5
        %s676 = scalar_lea.sflag [#allocation3], %s675
        %s677 = sshll.u32 %s656, 4
        %678 = dma.done %s676, %s677
        %s679 = sadd.s32 %s654, 6
        %s680 = scalar_lea.sflag [#allocation3], %s679
        %s681 = sshll.u32 %s656, 4
        %682 = dma.done %s680, %s681
        %s683 = sadd.s32 %s654, 7
        %s684 = scalar_lea.sflag [#allocation3], %s683
        %s685 = sshll.u32 %s656, 4
        %686 = dma.done %s684, %s685
        %s687 = scalar_lea.vmem [#allocation2], %s654
        %v688 = vld [vmem:[%s687] sm:$0xff]
        %v689 = vld [vmem:[%s190] sm:$0xff]
        %v690 = vadd.f32 %v688, %v689
        %691 = vadd.xlane.f32.xlu0 %v690
        %v692 = vpop.xlane.xlu0 %691
        %v693 = vmul.f32 %v692, 0.03125
        %v694 = vsub.f32 %v690, %v693
        %v695 = vlaneseq
        %v696 = vand.u32 %v695, 127
        %vm697 = vcmp.lt.s32.totalorder %v696, 32
        %v698 = vsel %vm697, 1, 0
        %v699 = vcvt.s32.f32 %v698
        %v700 = vmul.f32 %v694, %v699
        %v701 = vmul.f32 %v700, %v700
        %702 = vadd.xlane.f32.xlu0 %v701
        %v703 = vpop.xlane.xlu0 %702
        %v704 = vmul.f32 %v703, 0.03125
        %v705 = vadd.f32 %v704, 1e-12
        %v706 = vrsqrt.pop %v705
        %v707 = vmul.f32 %v706, %v705
        %v708 = vmul.f32 %v707, %v706
        %v709 = vmul.f32 0.5, %v708
        %v710 = vsub.f32 1.5, %v709
        %v711 = vmul.f32 %v706, %v710
        %vm712 = vweird.f32 %v705
        %vm713 = vweird.f32 %v706
        %vm714 = vmor %vm712, %vm713
        %v715 = vsel %vm714, %v706, %v711
        %v716 = vmul.f32 %v700, %v715
        %v717 = vld [vmem:[%s3] sm:$0x1]
        %v719 = vperm.slane %v717, 0
        %v721 = vmul.f32 %v716, %v719
        %v722 = vld [vmem:[%s4] sm:$0x1]
        %v724 = vperm.slane %v722, 0
        %v726 = vadd.f32 %v721, %v724
        %727 = vst [vmem:[%s213] sm:$0xff] %v726
        %s728 = sand.u32 %s122, 1
        %s729 = scalar_lea.sflag [#allocation8], %s728
        %s730 = sand.u32 %s122, 1
        %s731 = smul.addr %s730, 8
        %s732 = scalar_lea.vmem [#allocation9], %s731
        // Predicated region
        $region109: #{tpu_custom_call.1} parent=31 // pred_check
          %p733 = pneg %p132
        $region110: #{tpu_custom_call.1} parent=31 // pred_check_branch
          %735 = sbr.rel (%p733) target = $region112
        $region111: #{tpu_custom_call.1} parent=31 // pred_region
          %s736 = smul.u32 %s34, 2
          %s737 = sadd.s32 %s736, %s35
          %739 = vsyncadd %s729, 0
          %s740 = smul.addr %s737, 8
          %s741 = scalar_lea.hbm %s5, %s740
          %s743 = sshll.u32 %s732, 4
          %s744 = int_to_ptr.vmem [resolvable:$true] %s743
          %s745 = sshll.u32 %s741, 4
          %s746 = int_to_ptr.hbm [resolvable:$true] %s745
          %748 = dma.vmem_to_hbm [thread:$0]  %s744, 128, %s746, %s729
        $region112: #{tpu_custom_call.1} parent=31 // pred_fallthru
          _
      $region32: #{tpu_custom_call.1} parent=5 // pred_fallthru
        _
      %p749 = scmp.le.s32.totalorder 2, %s25
      // Predicated region
      $region113: #{tpu_custom_call.1} parent=5 // pred_check
        %p750 = pneg %p749
      $region114: #{tpu_custom_call.1} parent=5 // pred_check_branch
        %752 = sbr.rel (%p750) target = $region116
      $region115: #{tpu_custom_call.1} parent=5 // pred_region
        %s753 = ssub.s32 %s25, 2
        // Predicated region
        $region117: #{tpu_custom_call.1} parent=115 // pred_check
          %p754 = pneg %p138
        $region118: #{tpu_custom_call.1} parent=115 // pred_check_branch
          %756 = sbr.rel (%p754) target = $region120
        $region119: #{tpu_custom_call.1} parent=115 // pred_region
          %s757 = sand.u32 %s123, 1
          %s758 = scalar_lea.sflag [#allocation8], %s757
          %s759 = sand.u32 %s123, 1
          %s760 = smul.addr %s759, 8
          %s761 = scalar_lea.vmem [#allocation9], %s760
          %763 = dma.done %s758, 128
        $region120: #{tpu_custom_call.1} parent=115 // pred_fallthru
          _
      $region116: #{tpu_custom_call.1} parent=5 // pred_fallthru
        _
    $region6: #{tpu_custom_call.1} parent=1 // loop_footer
      %s29 = sadd.s32 1, %s25
    $region7: #{tpu_custom_call.1} parent=1 // loop_footer_branch
      %24 = sbr.rel target = $region3
    $region8: #{tpu_custom_call.1} parent=1 // loop_exit
      _
    %764 = vsyncpa [#allocation7], 1
    %s765 = scalar_lea.sflag [#allocation7], 1
    %766 = vsyncpa %s765, 1
    %767 = vsyncpa [#allocation8], 1
    %s768 = scalar_lea.sflag [#allocation8], 1
    %769 = vsyncpa %s768, 1
  %770 = vsyncmov [#allocation3]
  %s771 = vpop.sfrf %770
  %p772 = scmp.eq.s32.totalorder %s771, 0
  %p773 = pneg %p772
  %775 = shalt.err (%p773)
  %s776 = scalar_lea.sflag [#allocation3], 1
  %777 = vsyncmov %s776
  %s778 = vpop.sfrf %777
  %p779 = scmp.eq.s32.totalorder %s778, 0
  %p780 = pneg %p779
  %782 = shalt.err (%p780)
  %s783 = scalar_lea.sflag [#allocation3], 2
  %784 = vsyncmov %s783
  %s785 = vpop.sfrf %784
  %p786 = scmp.eq.s32.totalorder %s785, 0
  %p787 = pneg %p786
  %789 = shalt.err (%p787)
  %s790 = scalar_lea.sflag [#allocation3], 3
  %791 = vsyncmov %s790
  %s792 = vpop.sfrf %791
  %p793 = scmp.eq.s32.totalorder %s792, 0
  %p794 = pneg %p793
  %796 = shalt.err (%p794)
  %s797 = scalar_lea.sflag [#allocation3], 4
  %798 = vsyncmov %s797
  %s799 = vpop.sfrf %798
  %p800 = scmp.eq.s32.totalorder %s799, 0
  %p801 = pneg %p800
  %803 = shalt.err (%p801)
  %s804 = scalar_lea.sflag [#allocation3], 5
  %805 = vsyncmov %s804
  %s806 = vpop.sfrf %805
  %p807 = scmp.eq.s32.totalorder %s806, 0
  %p808 = pneg %p807
  %810 = shalt.err (%p808)
  %s811 = scalar_lea.sflag [#allocation3], 6
  %812 = vsyncmov %s811
  %s813 = vpop.sfrf %812
  %p814 = scmp.eq.s32.totalorder %s813, 0
  %p815 = pneg %p814
  %817 = shalt.err (%p815)
  %s818 = scalar_lea.sflag [#allocation3], 7
  %819 = vsyncmov %s818
  %s820 = vpop.sfrf %819
  %p821 = scmp.eq.s32.totalorder %s820, 0
  %p822 = pneg %p821
  %824 = shalt.err (%p822)
  %s825 = scalar_lea.sflag [#allocation3], 8
  %826 = vsyncmov %s825
  %s827 = vpop.sfrf %826
  %p828 = scmp.eq.s32.totalorder %s827, 0
  %p829 = pneg %p828
  %831 = shalt.err (%p829)
  %s832 = scalar_lea.sflag [#allocation3], 9
  %833 = vsyncmov %s832
  %s834 = vpop.sfrf %833
  %p835 = scmp.eq.s32.totalorder %s834, 0
  %p836 = pneg %p835
  %838 = shalt.err (%p836)
  %s839 = scalar_lea.sflag [#allocation3], 10
  %840 = vsyncmov %s839
  %s841 = vpop.sfrf %840
  %p842 = scmp.eq.s32.totalorder %s841, 0
  %p843 = pneg %p842
  %845 = shalt.err (%p843)
  %s846 = scalar_lea.sflag [#allocation3], 11
  %847 = vsyncmov %s846
  %s848 = vpop.sfrf %847
  %p849 = scmp.eq.s32.totalorder %s848, 0
  %p850 = pneg %p849
  %852 = shalt.err (%p850)
  %s853 = scalar_lea.sflag [#allocation3], 12
  %854 = vsyncmov %s853
  %s855 = vpop.sfrf %854
  %p856 = scmp.eq.s32.totalorder %s855, 0
  %p857 = pneg %p856
  %859 = shalt.err (%p857)
  %s860 = scalar_lea.sflag [#allocation3], 13
  %861 = vsyncmov %s860
  %s862 = vpop.sfrf %861
  %p863 = scmp.eq.s32.totalorder %s862, 0
  %p864 = pneg %p863
  %866 = shalt.err (%p864)
  %s867 = scalar_lea.sflag [#allocation3], 14
  %868 = vsyncmov %s867
  %s869 = vpop.sfrf %868
  %p870 = scmp.eq.s32.totalorder %s869, 0
  %p871 = pneg %p870
  %873 = shalt.err (%p871)
  %s874 = scalar_lea.sflag [#allocation3], 15
  %875 = vsyncmov %s874
  %s876 = vpop.sfrf %875
  %p877 = scmp.eq.s32.totalorder %s876, 0
  %p878 = pneg %p877
  %880 = shalt.err (%p878)

</llo_original>
